<compile_context>
chip_gen: v6e
topology: v6e:2x2x1
jax: 0.10.0
libtpu: 0.0.40
codegen_flags: <defaults>
</compile_context>

<pallas_src>
import functools
import math

import jax
import jax.numpy as jnp
from jax import lax
from jax.experimental import pallas as pl
from jax.experimental.pallas import tpu as pltpu


# --------------------------- sizing helpers ----------------------------------


def _sublane(dtype):
    """Sublane granularity for the second-to-last block dim (dtype aware)."""
    itemsize = jnp.dtype(dtype).itemsize
    return max(8, 32 // max(1, itemsize))   # 8 for f32, 16 for bf16, 32 for i8


def _pick_tile(dim, target, granularity):
    """Largest t <= target with dim % t == 0 and t % granularity == 0.

    Falls back to the full dim (a full-extent block is always legal)."""
    if dim <= target:
        return dim
    t = (target // granularity) * granularity
    while t >= granularity:
        if dim % t == 0:
            return t
        t -= granularity
    return dim


def _vmem_limit_bytes():
    """Generation-dependent scoped-VMEM budget (conservative fallback)."""
    try:
        cap = int(pltpu.get_tpu_info().vmem_capacity_bytes)
        return int(min(cap // 2, 96 * 1024 * 1024))
    except Exception:
        return 32 * 1024 * 1024


# ------------------------- generic tiled linear ------------------------------
# Used for the q/k/v projections (fused over heads: N = H*K) and for the final
# dense layer.  Torch-layout [Dout, Din] weights are consumed by contracting
# the last axes (no wrapper-side transpose of the weight).


def _linear_kernel(x_ref, w_ref, b_ref, o_ref, acc_ref):
    # x: (tm, tk)  w: (tn, tk)  b: (1, tn)  o: (tm, tn)
    kk = pl.program_id(2)

    @pl.when(kk == 0)
    def _init():
        acc_ref[...] = jnp.zeros_like(acc_ref)

    acc_ref[...] += lax.dot_general(
        x_ref[...], w_ref[...],
        dimension_numbers=(((1,), (1,)), ((), ())),   # contract the Din axes
        preferred_element_type=jnp.float32)

    @pl.when(kk == pl.num_programs(2) - 1)
    def _finalize():
        o_ref[...] = (acc_ref[...] + b_ref[...]).astype(o_ref.dtype)


def linear(x, w, b, *, vmem_limit):
    """x: [M, Din]; w: [Dout, Din] (torch layout); b: [Dout] -> [M, Dout]."""
    M, Din = x.shape
    Dout = w.shape[0]
    tm = _pick_tile(M, 512, _sublane(x.dtype))
    tn = _pick_tile(Dout, 512, 128)
    tk = _pick_tile(Din, 512, 128)
    grid = (M // tm, Dout // tn, Din // tk)
    return pl.pallas_call(
        _linear_kernel,
        out_shape=jax.ShapeDtypeStruct((M, Dout), x.dtype),
        grid=grid,
        in_specs=[
            pl.BlockSpec((tm, tk), lambda i, j, k: (i, k)),
            pl.BlockSpec((tn, tk), lambda i, j, k: (j, k)),
            pl.BlockSpec((1, tn), lambda i, j, k: (0, j)),
        ],
        out_specs=pl.BlockSpec((tm, tn), lambda i, j, k: (i, j)),
        scratch_shapes=[pltpu.VMEM((tm, tn), jnp.float32)],
        compiler_params=pltpu.CompilerParams(
            dimension_semantics=("parallel", "parallel", "arbitrary"),
            vmem_limit_bytes=vmem_limit),
    )(x, w, b.reshape(1, Dout))


# ----------------------------- attention kernel ------------------------------


def _attn_kernel(q_ref, k_ref, v_ref, attn_ref, ctx_ref, *,
                 num_heads, dim_head, scale):
    # q: (1, tq, H*K)   k: (1, T, H*K)   v: (1, H, T, K)  (swap baked in)
    # attn: (1, H, tq, T)   ctx: (1, tq, H*K)
    H, K = num_heads, dim_head
    for h in range(H):                          # static unroll over heads
        lo, hi = h * K, (h + 1) * K
        q = q_ref[0, :, lo:hi] * scale          # pre-scale q (tq*K elems)
        k = k_ref[0, :, lo:hi]
        sim = lax.dot_general(
            q, k, dimension_numbers=(((1,), (1,)), ((), ())),
            preferred_element_type=jnp.float32)              # (tq, T)
        m = jnp.max(sim, axis=-1, keepdims=True)
        e = jnp.exp(sim - m)
        denom = jnp.sum(e, axis=-1, keepdims=True)
        p = e * pl.reciprocal(denom, approx=True)            # EUP reciprocal
        attn_ref[0, h] = p.astype(attn_ref.dtype)
        v = v_ref[0, h]                                      # (T, K), native dtype
        ctx = jnp.dot(p.astype(v.dtype), v,
                      preferred_element_type=jnp.float32)    # (tq, K)
        # slice-store per head: frees this head's registers immediately and the
        # HBM writeback of the (1, tq, H*K) block stays fully lane-dense.
        ctx_ref[0, :, lo:hi] = ctx.astype(ctx_ref.dtype)


def attention_pallas(q_fused, k_fused, v_swapped, scale, *,
                     num_heads, dim_head, vmem_limit):
    """q/k: [B, T, H*K] (lane dense); v_swapped: [B, H, T, K] with the
    reference's value.transpose(0,1) baked in -> (ctx [B,T,H*K], attn [B,H,T,T])."""
    B, T, HK = q_fused.shape
    H, K = num_heads, dim_head
    itemsize = jnp.dtype(q_fused.dtype).itemsize
    gran = _sublane(q_fused.dtype)

    # Size tq against the VMEM budget (double-buffered in/out blocks + one f32
    # score tile).  TODO(synk): true flash-style KV tiling for very long T.
    tq = T
    for target in (512, 256, 128, 64, 32, 16, 8):
        cand = _pick_tile(T, target, gran)
        blocks = (cand * HK            # q block
                  + T * HK             # k block (whole T)
                  + H * T * K          # v block (whole T)
                  + H * cand * T       # attn out block
                  + cand * HK)         # ctx out block
        est = 2 * blocks * itemsize + 4 * cand * T + 4 * cand * HK
        tq = cand
        if est <= vmem_limit:
            break

    kernel = functools.partial(_attn_kernel, num_heads=H, dim_head=K, scale=scale)
    attn, ctx = pl.pallas_call(
        kernel,
        out_shape=(
            jax.ShapeDtypeStruct((B, H, T, T), q_fused.dtype),
            jax.ShapeDtypeStruct((B, T, HK), q_fused.dtype),
        ),
        grid=(T // tq, B),   # large query-tile axis leads (megacore sharding)
        in_specs=[
            pl.BlockSpec((1, tq, HK), lambda qi, b: (b, qi, 0)),
            pl.BlockSpec((1, T, HK), lambda qi, b: (b, 0, 0)),
            pl.BlockSpec((1, H, T, K), lambda qi, b: (b, 0, 0, 0)),
        ],
        out_specs=(
            pl.BlockSpec((1, H, tq, T), lambda qi, b: (b, 0, qi, 0)),
            pl.BlockSpec((1, tq, HK), lambda qi, b: (b, qi, 0)),
        ),
        compiler_params=pltpu.CompilerParams(
            dimension_semantics=("parallel", "parallel"),
            vmem_limit_bytes=vmem_limit),
    )(q_fused, k_fused, v_swapped)
    return ctx, attn


# ----------------------------- module wrapper --------------------------------


def init_mha_params(key, hidden_dim, num_heads, dim_head):
    inner = num_heads * dim_head
    keys = jax.random.split(key, 8)

    def lin_init(kw, kb, fan_in, fan_out):
        bound = 1.0 / math.sqrt(fan_in)
        w = jax.random.uniform(kw, (fan_out, fan_in), jnp.float32, -bound, bound)
        b = jax.random.uniform(kb, (fan_out,), jnp.float32, -bound, bound)
        return w, b

    wq, bq = lin_init(keys[0], keys[1], hidden_dim, inner)
    wk, bk = lin_init(keys[2], keys[3], hidden_dim, inner)
    wv, bv = lin_init(keys[4], keys[5], hidden_dim, inner)
    wd, bd = lin_init(keys[6], keys[7], inner, hidden_dim)
    return dict(wq=wq, bq=bq, wk=wk, bk=bk, wv=wv, bv=bv, wd=wd, bd=bd)


def multi_head_attention(params, query, key, value, *, num_heads, dim_head):
    B, T, D = query.shape
    H, K = num_heads, dim_head
    assert B == H, "reference module's value.transpose(0,1) requires B == num_heads"
    vmem_limit = _vmem_limit_bytes()

    # Fused, lane-dense projections: one full-width [B*T, H*K] matmul each
    # (no per-head grid axis, no H x re-streaming of the activation, no
    # [B, H, T, K] partial-lane stores).
    def proj(x, w, b):
        return linear(x.reshape(B * T, D), w, b,
                      vmem_limit=vmem_limit).reshape(B, T, H * K)

    q_fused = proj(query, params["wq"], params["bq"])
    k_fused = proj(key, params["wk"], params["bk"])
    v_fused = proj(value, params["wv"], params["bv"])

    # Bake the reference's value.transpose(0, 1) quirk into a head-major value
    # tensor: v_swapped[b, h, t, k] = v[batch=h, head=b, t, k]  (needs B == H).
    # This single cheap relayout of v keeps every kernel block (8,128)-legal
    # for arbitrary dim_head; q/k/ctx never leave the fused lane-dense layout.
    v4 = v_fused.reshape(B, T, H, K)
    v_swapped = jnp.transpose(v4, (2, 0, 1, 3))   # [B(=H), H(=B), T, K]

    # NOTE: reference scale uses key.shape[1] == num_heads (not dim_head).
    scale = 1.0 / math.sqrt(H)
    ctx, attn = attention_pallas(q_fused, k_fused, v_swapped, scale,
                                 num_heads=H, dim_head=K, vmem_limit=vmem_limit)

    out = linear(ctx.reshape(B * T, H * K), params["wd"], params["bd"],
                 vmem_limit=vmem_limit)
    return out.reshape(B, T, D), attn


# ----------------------------- pure-JAX reference ----------------------------


def multi_head_attention_ref(params, query, key, value, *, num_heads, dim_head):
    B, T, D = query.shape
    H, K = num_heads, dim_head

    def lin(x, w, b):
        return x @ w.T + b

    q = lin(query, params["wq"], params["bq"]).reshape(B, T, H, K).transpose(0, 2, 1, 3)
    k = lin(key, params["wk"], params["bk"]).reshape(B, T, H, K).transpose(0, 2, 1, 3)
    v = lin(value, params["wv"], params["bv"]).reshape(B, T, H, K).transpose(0, 2, 1, 3)

    sim = jnp.einsum("bhtk,bhsk->bhts", q, k) * (1.0 / math.sqrt(H))
    attn = jax.nn.softmax(sim, axis=-1)
    # ctx[b, h] = attn[b, h] @ v[h, b]   (the value.transpose(0,1) quirk)
    ctx = jnp.einsum("bhts,hbsk->bhtk", attn, v)
    ctx = ctx.transpose(0, 2, 1, 3).reshape(B, T, H * K)
    out = lin(ctx, params["wd"], params["bd"])
    return out, attn


# ----------------------------------- main -------------------------------------

if __name__ == "__main__":
    B, T, D = 2, 8, 32
    num_heads, dim_head = 2, 16      # B must equal num_heads (see note above)

    root = jax.random.PRNGKey(0)
    kp, kq, kk, kv = jax.random.split(root, 4)
    params = init_mha_params(kp, D, num_heads, dim_head)

    query = jax.random.normal(kq, (B, T, D), jnp.float32)
    key = jax.random.normal(kk, (B, T, D), jnp.float32)
    value = jax.random.normal(kv, (B, T, D), jnp.float32)

    fwd = jax.jit(functools.partial(
        multi_head_attention, num_heads=num_heads, dim_head=dim_head))
    out, attn = fwd(params, query, key, value)
    out = jax.block_until_ready(out)
    attn = jax.block_until_ready(attn)

    out_ref, attn_ref = multi_head_attention_ref(
        params, query, key, value, num_heads=num_heads, dim_head=dim_head)

    assert out.shape == (B, T, D)
    assert attn.shape == (B, num_heads, T, T)
    # tolerance accounts for the approximate EUP reciprocal in the softmax denom
    assert jnp.allclose(attn, attn_ref, atol=1e-3, rtol=2e-3)
    assert jnp.allclose(out, out_ref, atol=2e-3, rtol=2e-3)

    print("KERNEL_OK")
</pallas_src>

<mosaic_0001>
module attributes {stable_mosaic.version = 11 : i64} {
  func.func @_linear_kernel(%arg0: i32, %arg1: i32, %arg2: i32, %arg3: memref<16x32xf32, #tpu.memory_space<vmem>>, %arg4: memref<32x32xf32, #tpu.memory_space<vmem>>, %arg5: memref<1x32xf32, #tpu.memory_space<vmem>>, %arg6: memref<16x32xf32, #tpu.memory_space<vmem>>, %arg7: memref<16x32xf32, #tpu.memory_space<vmem>>) attributes {dimension_semantics = [#tpu.dimension_semantics<parallel>, #tpu.dimension_semantics<parallel>, #tpu.dimension_semantics<arbitrary>], iteration_bounds = array<i64: 1, 1, 1>, scalar_prefetch = 0 : i64, scratch_operands = 1 : i64, tpu.core_type = #tpu.core_type<tc>, window_params = [{transform_indices = @transform_0, window_bounds = array<i64: 16, 32>}, {transform_indices = @transform_1, window_bounds = array<i64: 32, 32>}, {transform_indices = @transform_2, window_bounds = array<i64: 1, 32>}, {transform_indices = @transform_3, window_bounds = array<i64: 16, 32>}]} {
    %c0_i32 = arith.constant 0 : i32
    %0 = arith.cmpi eq, %arg2, %c0_i32 : i32
    %1 = arith.extui %0 : i1 to i32
    %c0_i32_0 = arith.constant 0 : i32
    %2 = arith.cmpi ne, %1, %c0_i32_0 : i32
    scf.if %2 {
      %cst_10 = arith.constant 0.000000e+00 : f32
      %12 = vector.broadcast %cst_10 : f32 to vector<16x32xf32>
      %c0_11 = arith.constant 0 : index
      %c0_12 = arith.constant 0 : index
      %13 = vector.load %arg7[%c0_11, %c0_12] : memref<16x32xf32, #tpu.memory_space<vmem>>, vector<16x32xf32>
      tpu.vector_store %arg7[%c0_11, %c0_12], %12 {strides = array<i32>} : memref<16x32xf32, #tpu.memory_space<vmem>>, vector<16x32xf32>,
    } else {
    }
    %c0 = arith.constant 0 : index
    %c0_1 = arith.constant 0 : index
    %3 = vector.load %arg7[%c0, %c0_1] : memref<16x32xf32, #tpu.memory_space<vmem>>, vector<16x32xf32>
    %c0_2 = arith.constant 0 : index
    %c0_3 = arith.constant 0 : index
    %4 = vector.load %arg3[%c0_2, %c0_3] : memref<16x32xf32, #tpu.memory_space<vmem>>, vector<16x32xf32>
    %c0_4 = arith.constant 0 : index
    %c0_5 = arith.constant 0 : index
    %5 = vector.load %arg4[%c0_4, %c0_5] : memref<32x32xf32, #tpu.memory_space<vmem>>, vector<32x32xf32>
    %cst = arith.constant dense<0.000000e+00> : vector<16x32xf32>
    %6 = tpu.matmul %4, %5, %cst {dimension_numbers = #tpu.dot_dimension_numbers<[1], [1], [0], [0], [0, 0, 1, 0], [], []>} : vector<16x32xf32>, vector<32x32xf32>, vector<16x32xf32> -> vector<16x32xf32>
    %7 = arith.addf %3, %6 : vector<16x32xf32>
    %c0_6 = arith.constant 0 : index
    %c0_7 = arith.constant 0 : index
    %8 = vector.load %arg7[%c0_6, %c0_7] : memref<16x32xf32, #tpu.memory_space<vmem>>, vector<16x32xf32>
    tpu.vector_store %arg7[%c0_6, %c0_7], %7 {strides = array<i32>} : memref<16x32xf32, #tpu.memory_space<vmem>>, vector<16x32xf32>,
    %c0_i32_8 = arith.constant 0 : i32
    %9 = arith.cmpi eq, %arg2, %c0_i32_8 : i32
    %10 = arith.extui %9 : i1 to i32
    %c0_i32_9 = arith.constant 0 : i32
    %11 = arith.cmpi ne, %10, %c0_i32_9 : i32
    scf.if %11 {
      %c0_10 = arith.constant 0 : index
      %c0_11 = arith.constant 0 : index
      %12 = vector.load %arg7[%c0_10, %c0_11] : memref<16x32xf32, #tpu.memory_space<vmem>>, vector<16x32xf32>
      %c0_12 = arith.constant 0 : index
      %c0_13 = arith.constant 0 : index
      %13 = vector.load %arg5[%c0_12, %c0_13] : memref<1x32xf32, #tpu.memory_space<vmem>>, vector<1x32xf32>
      %14 = vector.broadcast %13 : vector<1x32xf32> to vector<16x32xf32>
      %15 = arith.addf %12, %14 : vector<16x32xf32>
      %c0_14 = arith.constant 0 : index
      %c0_15 = arith.constant 0 : index
      %16 = vector.load %arg6[%c0_14, %c0_15] : memref<16x32xf32, #tpu.memory_space<vmem>>, vector<16x32xf32>
      tpu.vector_store %arg6[%c0_14, %c0_15], %15 {strides = array<i32>} : memref<16x32xf32, #tpu.memory_space<vmem>>, vector<16x32xf32>,
    } else {
    }
    return
  }
  func.func @transform_0(%arg0: i32, %arg1: i32, %arg2: i32) -> (i32, i32) {
    %c0_i32 = arith.constant 0 : i32
    return %arg0, %arg2 : i32, i32
  }
  func.func @transform_1(%arg0: i32, %arg1: i32, %arg2: i32) -> (i32, i32) {
    %c0_i32 = arith.constant 0 : i32
    return %arg1, %arg2 : i32, i32
  }
  func.func @transform_2(%arg0: i32, %arg1: i32, %arg2: i32) -> (i32, i32) {
    %c0_i32 = arith.constant 0 : i32
    %c0_i32_0 = arith.constant 0 : i32
    return %c0_i32, %arg1 : i32, i32
  }
  func.func @transform_3(%arg0: i32, %arg1: i32, %arg2: i32) -> (i32, i32) {
    %c0_i32 = arith.constant 0 : i32
    return %arg0, %arg1 : i32, i32
  }
}

module attributes {stable_mosaic.version = 11 : i64} {
  func.func @_linear_kernel(%arg0: i32, %arg1: i32, %arg2: i32, %arg3: memref<16x32xf32, #tpu.memory_space<vmem>>, %arg4: memref<32x32xf32, #tpu.memory_space<vmem>>, %arg5: memref<1x32xf32, #tpu.memory_space<vmem>>, %arg6: memref<16x32xf32, #tpu.memory_space<vmem>>, %arg7: memref<16x32xf32, #tpu.memory_space<vmem>>) attributes {dimension_semantics = [#tpu.dimension_semantics<parallel>, #tpu.dimension_semantics<parallel>, #tpu.dimension_semantics<arbitrary>], iteration_bounds = array<i64: 1, 1, 1>, scalar_prefetch = 0 : i64, scratch_operands = 1 : i64, tpu.core_type = #tpu.core_type<tc>, window_params = [{transform_indices = @transform_0, window_bounds = array<i64: 16, 32>}, {transform_indices = @transform_1, window_bounds = array<i64: 32, 32>}, {transform_indices = @transform_2, window_bounds = array<i64: 1, 32>}, {transform_indices = @transform_3, window_bounds = array<i64: 16, 32>}]} {
    %c0_i32 = arith.constant 0 : i32
    %0 = arith.cmpi eq, %arg2, %c0_i32 : i32
    %1 = arith.extui %0 : i1 to i32
    %c0_i32_0 = arith.constant 0 : i32
    %2 = arith.cmpi ne, %1, %c0_i32_0 : i32
    scf.if %2 {
      %cst_10 = arith.constant 0.000000e+00 : f32
      %12 = vector.broadcast %cst_10 : f32 to vector<16x32xf32>
      %c0_11 = arith.constant 0 : index
      %c0_12 = arith.constant 0 : index
      %13 = vector.load %arg7[%c0_11, %c0_12] : memref<16x32xf32, #tpu.memory_space<vmem>>, vector<16x32xf32>
      tpu.vector_store %arg7[%c0_11, %c0_12], %12 {strides = array<i32>} : memref<16x32xf32, #tpu.memory_space<vmem>>, vector<16x32xf32>,
    } else {
    }
    %c0 = arith.constant 0 : index
    %c0_1 = arith.constant 0 : index
    %3 = vector.load %arg7[%c0, %c0_1] : memref<16x32xf32, #tpu.memory_space<vmem>>, vector<16x32xf32>
    %c0_2 = arith.constant 0 : index
    %c0_3 = arith.constant 0 : index
    %4 = vector.load %arg3[%c0_2, %c0_3] : memref<16x32xf32, #tpu.memory_space<vmem>>, vector<16x32xf32>
    %c0_4 = arith.constant 0 : index
    %c0_5 = arith.constant 0 : index
    %5 = vector.load %arg4[%c0_4, %c0_5] : memref<32x32xf32, #tpu.memory_space<vmem>>, vector<32x32xf32>
    %cst = arith.constant dense<0.000000e+00> : vector<16x32xf32>
    %6 = tpu.matmul %4, %5, %cst {dimension_numbers = #tpu.dot_dimension_numbers<[1], [1], [0], [0], [0, 0, 1, 0], [], []>} : vector<16x32xf32>, vector<32x32xf32>, vector<16x32xf32> -> vector<16x32xf32>
    %7 = arith.addf %3, %6 : vector<16x32xf32>
    %c0_6 = arith.constant 0 : index
    %c0_7 = arith.constant 0 : index
    %8 = vector.load %arg7[%c0_6, %c0_7] : memref<16x32xf32, #tpu.memory_space<vmem>>, vector<16x32xf32>
    tpu.vector_store %arg7[%c0_6, %c0_7], %7 {strides = array<i32>} : memref<16x32xf32, #tpu.memory_space<vmem>>, vector<16x32xf32>,
    %c0_i32_8 = arith.constant 0 : i32
    %9 = arith.cmpi eq, %arg2, %c0_i32_8 : i32
    %10 = arith.extui %9 : i1 to i32
    %c0_i32_9 = arith.constant 0 : i32
    %11 = arith.cmpi ne, %10, %c0_i32_9 : i32
    scf.if %11 {
      %c0_10 = arith.constant 0 : index
      %c0_11 = arith.constant 0 : index
      %12 = vector.load %arg7[%c0_10, %c0_11] : memref<16x32xf32, #tpu.memory_space<vmem>>, vector<16x32xf32>
      %c0_12 = arith.constant 0 : index
      %c0_13 = arith.constant 0 : index
      %13 = vector.load %arg5[%c0_12, %c0_13] : memref<1x32xf32, #tpu.memory_space<vmem>>, vector<1x32xf32>
      %14 = vector.broadcast %13 : vector<1x32xf32> to vector<16x32xf32>
      %15 = arith.addf %12, %14 : vector<16x32xf32>
      %c0_14 = arith.constant 0 : index
      %c0_15 = arith.constant 0 : index
      %16 = vector.load %arg6[%c0_14, %c0_15] : memref<16x32xf32, #tpu.memory_space<vmem>>, vector<16x32xf32>
      tpu.vector_store %arg6[%c0_14, %c0_15], %15 {strides = array<i32>} : memref<16x32xf32, #tpu.memory_space<vmem>>, vector<16x32xf32>,
    } else {
    }
    return
  }
  func.func @transform_0(%arg0: i32, %arg1: i32, %arg2: i32) -> (i32, i32) {
    %c0_i32 = arith.constant 0 : i32
    return %arg0, %arg2 : i32, i32
  }
  func.func @transform_1(%arg0: i32, %arg1: i32, %arg2: i32) -> (i32, i32) {
    %c0_i32 = arith.constant 0 : i32
    return %arg1, %arg2 : i32, i32
  }
  func.func @transform_2(%arg0: i32, %arg1: i32, %arg2: i32) -> (i32, i32) {
    %c0_i32 = arith.constant 0 : i32
    %c0_i32_0 = arith.constant 0 : i32
    return %c0_i32, %arg1 : i32, i32
  }
  func.func @transform_3(%arg0: i32, %arg1: i32, %arg2: i32) -> (i32, i32) {
    %c0_i32 = arith.constant 0 : i32
    return %arg0, %arg1 : i32, i32
  }
}

module attributes {stable_mosaic.version = 11 : i64} {
  func.func @_attn_kernel(%arg0: i32, %arg1: i32, %arg2: memref<1x8x32xf32, #tpu.memory_space<vmem>>, %arg3: memref<1x8x32xf32, #tpu.memory_space<vmem>>, %arg4: memref<1x2x8x16xf32, #tpu.memory_space<vmem>>, %arg5: memref<1x2x8x8xf32, #tpu.memory_space<vmem>>, %arg6: memref<1x8x32xf32, #tpu.memory_space<vmem>>) attributes {dimension_semantics = [#tpu.dimension_semantics<parallel>, #tpu.dimension_semantics<parallel>], iteration_bounds = array<i64: 1, 2>, scalar_prefetch = 0 : i64, scratch_operands = 0 : i64, tpu.core_type = #tpu.core_type<tc>, window_params = [{transform_indices = @transform_0, window_bounds = array<i64: 1, 8, 32>}, {transform_indices = @transform_1, window_bounds = array<i64: 1, 8, 32>}, {transform_indices = @transform_2, window_bounds = array<i64: 1, 2, 8, 16>}, {transform_indices = @transform_3, window_bounds = array<i64: 1, 2, 8, 8>}, {transform_indices = @transform_4, window_bounds = array<i64: 1, 8, 32>}]} {
    %c0 = arith.constant 0 : index
    %c0_0 = arith.constant 0 : index
    %c0_1 = arith.constant 0 : index
    %0 = vector.load %arg2[%c0, %c0_0, %c0_1] : memref<1x8x32xf32, #tpu.memory_space<vmem>>, vector<1x8x16xf32>
    %1 = vector.shape_cast %0 : vector<1x8x16xf32> to vector<8x16xf32>
    %cst = arith.constant 0.707106769 : f32
    %2 = vector.broadcast %cst : f32 to vector<8x16xf32>
    %3 = arith.mulf %1, %2 : vector<8x16xf32>
    %c0_2 = arith.constant 0 : index
    %c0_3 = arith.constant 0 : index
    %c0_4 = arith.constant 0 : index
    %4 = vector.load %arg3[%c0_2, %c0_3, %c0_4] : memref<1x8x32xf32, #tpu.memory_space<vmem>>, vector<1x8x16xf32>
    %5 = vector.shape_cast %4 : vector<1x8x16xf32> to vector<8x16xf32>
    %cst_5 = arith.constant dense<0.000000e+00> : vector<8x8xf32>
    %6 = tpu.matmul %3, %5, %cst_5 {dimension_numbers = #tpu.dot_dimension_numbers<[1], [1], [0], [0], [0, 0, 1, 0], [], []>} : vector<8x16xf32>, vector<8x16xf32>, vector<8x8xf32> -> vector<8x8xf32>
    %cst_6 = arith.constant dense<0xFF800000> : vector<8xf32>
    %7 = vector.multi_reduction <maximumf>, %6, %cst_6 [1] : vector<8x8xf32> to vector<8xf32>
    %8 = vector.shape_cast %7 : vector<8xf32> to vector<8x1xf32>
    %9 = vector.broadcast %8 : vector<8x1xf32> to vector<8x8xf32>
    %10 = arith.subf %6, %9 : vector<8x8xf32>
    %11 = math.exp %10 : vector<8x8xf32>
    %cst_7 = arith.constant dense<0.000000e+00> : vector<8xf32>
    %12 = vector.multi_reduction <add>, %11, %cst_7 [1] : vector<8x8xf32> to vector<8xf32>
    %13 = vector.shape_cast %12 : vector<8xf32> to vector<8x1xf32>
    %14 = tpu.reciprocal %13 {approx = true} : vector<8x1xf32> -> vector<8x1xf32>
    %15 = vector.broadcast %14 : vector<8x1xf32> to vector<8x8xf32>
    %16 = arith.mulf %11, %15 : vector<8x8xf32>
    %c0_8 = arith.constant 0 : index
    %c0_9 = arith.constant 0 : index
    %c0_10 = arith.constant 0 : index
    %c0_11 = arith.constant 0 : index
    %17 = vector.load %arg5[%c0_8, %c0_9, %c0_10, %c0_11] : memref<1x2x8x8xf32, #tpu.memory_space<vmem>>, vector<1x1x8x8xf32>
    %18 = vector.shape_cast %17 : vector<1x1x8x8xf32> to vector<8x8xf32>
    %19 = vector.shape_cast %16 : vector<8x8xf32> to vector<1x1x8x8xf32>
    tpu.vector_store %arg5[%c0_8, %c0_9, %c0_10, %c0_11], %19 {strides = array<i32>} : memref<1x2x8x8xf32, #tpu.memory_space<vmem>>, vector<1x1x8x8xf32>,
    %c0_12 = arith.constant 0 : index
    %c0_13 = arith.constant 0 : index
    %c0_14 = arith.constant 0 : index
    %c0_15 = arith.constant 0 : index
    %20 = vector.load %arg4[%c0_12, %c0_13, %c0_14, %c0_15] : memref<1x2x8x16xf32, #tpu.memory_space<vmem>>, vector<1x1x8x16xf32>
    %21 = vector.shape_cast %20 : vector<1x1x8x16xf32> to vector<8x16xf32>
    %cst_16 = arith.constant dense<0.000000e+00> : vector<8x16xf32>
    %22 = tpu.matmul %16, %21, %cst_16 {dimension_numbers = #tpu.dot_dimension_numbers<[1], [0], [0], [1], [0, 0, 1, 1], [], []>} : vector<8x8xf32>, vector<8x16xf32>, vector<8x16xf32> -> vector<8x16xf32>
    %c0_17 = arith.constant 0 : index
    %c0_18 = arith.constant 0 : index
    %c0_19 = arith.constant 0 : index
    %23 = vector.load %arg6[%c0_17, %c0_18, %c0_19] : memref<1x8x32xf32, #tpu.memory_space<vmem>>, vector<1x8x16xf32>
    %24 = vector.shape_cast %23 : vector<1x8x16xf32> to vector<8x16xf32>
    %25 = vector.shape_cast %22 : vector<8x16xf32> to vector<1x8x16xf32>
    tpu.vector_store %arg6[%c0_17, %c0_18, %c0_19], %25 {strides = array<i32>} : memref<1x8x32xf32, #tpu.memory_space<vmem>>, vector<1x8x16xf32>,
    %c0_20 = arith.constant 0 : index
    %c0_21 = arith.constant 0 : index
    %c16 = arith.constant 16 : index
    %26 = vector.load %arg2[%c0_20, %c0_21, %c16] : memref<1x8x32xf32, #tpu.memory_space<vmem>>, vector<1x8x16xf32>
    %27 = vector.shape_cast %26 : vector<1x8x16xf32> to vector<8x16xf32>
    %cst_22 = arith.constant 0.707106769 : f32
    %28 = vector.broadcast %cst_22 : f32 to vector<8x16xf32>
    %29 = arith.mulf %27, %28 : vector<8x16xf32>
    %c0_23 = arith.constant 0 : index
    %c0_24 = arith.constant 0 : index
    %c16_25 = arith.constant 16 : index
    %30 = vector.load %arg3[%c0_23, %c0_24, %c16_25] : memref<1x8x32xf32, #tpu.memory_space<vmem>>, vector<1x8x16xf32>
    %31 = vector.shape_cast %30 : vector<1x8x16xf32> to vector<8x16xf32>
    %cst_26 = arith.constant dense<0.000000e+00> : vector<8x8xf32>
    %32 = tpu.matmul %29, %31, %cst_26 {dimension_numbers = #tpu.dot_dimension_numbers<[1], [1], [0], [0], [0, 0, 1, 0], [], []>} : vector<8x16xf32>, vector<8x16xf32>, vector<8x8xf32> -> vector<8x8xf32>
    %cst_27 = arith.constant dense<0xFF800000> : vector<8xf32>
    %33 = vector.multi_reduction <maximumf>, %32, %cst_27 [1] : vector<8x8xf32> to vector<8xf32>
    %34 = vector.shape_cast %33 : vector<8xf32> to vector<8x1xf32>
    %35 = vector.broadcast %34 : vector<8x1xf32> to vector<8x8xf32>
    %36 = arith.subf %32, %35 : vector<8x8xf32>
    %37 = math.exp %36 : vector<8x8xf32>
    %cst_28 = arith.constant dense<0.000000e+00> : vector<8xf32>
    %38 = vector.multi_reduction <add>, %37, %cst_28 [1] : vector<8x8xf32> to vector<8xf32>
    %39 = vector.shape_cast %38 : vector<8xf32> to vector<8x1xf32>
    %40 = tpu.reciprocal %39 {approx = true} : vector<8x1xf32> -> vector<8x1xf32>
    %41 = vector.broadcast %40 : vector<8x1xf32> to vector<8x8xf32>
    %42 = arith.mulf %37, %41 : vector<8x8xf32>
    %c0_29 = arith.constant 0 : index
    %c1 = arith.constant 1 : index
    %c0_30 = arith.constant 0 : index
    %c0_31 = arith.constant 0 : index
    %43 = vector.load %arg5[%c0_29, %c1, %c0_30, %c0_31] : memref<1x2x8x8xf32, #tpu.memory_space<vmem>>, vector<1x1x8x8xf32>
    %44 = vector.shape_cast %43 : vector<1x1x8x8xf32> to vector<8x8xf32>
    %45 = vector.shape_cast %42 : vector<8x8xf32> to vector<1x1x8x8xf32>
    tpu.vector_store %arg5[%c0_29, %c1, %c0_30, %c0_31], %45 {strides = array<i32>} : memref<1x2x8x8xf32, #tpu.memory_space<vmem>>, vector<1x1x8x8xf32>,
    %c0_32 = arith.constant 0 : index
    %c1_33 = arith.constant 1 : index
    %c0_34 = arith.constant 0 : index
    %c0_35 = arith.constant 0 : index
    %46 = vector.load %arg4[%c0_32, %c1_33, %c0_34, %c0_35] : memref<1x2x8x16xf32, #tpu.memory_space<vmem>>, vector<1x1x8x16xf32>
    %47 = vector.shape_cast %46 : vector<1x1x8x16xf32> to vector<8x16xf32>
    %cst_36 = arith.constant dense<0.000000e+00> : vector<8x16xf32>
    %48 = tpu.matmul %42, %47, %cst_36 {dimension_numbers = #tpu.dot_dimension_numbers<[1], [0], [0], [1], [0, 0, 1, 1], [], []>} : vector<8x8xf32>, vector<8x16xf32>, vector<8x16xf32> -> vector<8x16xf32>
    %c0_37 = arith.constant 0 : index
    %c0_38 = arith.constant 0 : index
    %c16_39 = arith.constant 16 : index
    %49 = vector.load %arg6[%c0_37, %c0_38, %c16_39] : memref<1x8x32xf32, #tpu.memory_space<vmem>>, vector<1x8x16xf32>
    %50 = vector.shape_cast %49 : vector<1x8x16xf32> to vector<8x16xf32>
    %51 = vector.shape_cast %48 : vector<8x16xf32> to vector<1x8x16xf32>
    tpu.vector_store %arg6[%c0_37, %c0_38, %c16_39], %51 {strides = array<i32>} : memref<1x8x32xf32, #tpu.memory_space<vmem>>, vector<1x8x16xf32>,
    return
  }
  func.func @transform_0(%arg0: i32, %arg1: i32) -> (i32, i32, i32) {
    %c0_i32 = arith.constant 0 : i32
    %c0_i32_0 = arith.constant 0 : i32
    return %arg1, %arg0, %c0_i32 : i32, i32, i32
  }
  func.func @transform_1(%arg0: i32, %arg1: i32) -> (i32, i32, i32) {
    %c0_i32 = arith.constant 0 : i32
    %c0_i32_0 = arith.constant 0 : i32
    %c0_i32_1 = arith.constant 0 : i32
    return %arg1, %c0_i32, %c0_i32_0 : i32, i32, i32
  }
  func.func @transform_2(%arg0: i32, %arg1: i32) -> (i32, i32, i32, i32) {
    %c0_i32 = arith.constant 0 : i32
    %c0_i32_0 = arith.constant 0 : i32
    %c0_i32_1 = arith.constant 0 : i32
    %c0_i32_2 = arith.constant 0 : i32
    return %arg1, %c0_i32, %c0_i32_0, %c0_i32_1 : i32, i32, i32, i32
  }
  func.func @transform_3(%arg0: i32, %arg1: i32) -> (i32, i32, i32, i32) {
    %c0_i32 = arith.constant 0 : i32
    %c0_i32_0 = arith.constant 0 : i32
    %c0_i32_1 = arith.constant 0 : i32
    return %arg1, %c0_i32, %arg0, %c0_i32_0 : i32, i32, i32, i32
  }
  func.func @transform_4(%arg0: i32, %arg1: i32) -> (i32, i32, i32) {
    %c0_i32 = arith.constant 0 : i32
    %c0_i32_0 = arith.constant 0 : i32
    return %arg1, %arg0, %c0_i32 : i32, i32, i32
  }
}

module attributes {stable_mosaic.version = 11 : i64} {
  func.func @_linear_kernel(%arg0: i32, %arg1: i32, %arg2: i32, %arg3: memref<16x32xf32, #tpu.memory_space<vmem>>, %arg4: memref<32x32xf32, #tpu.memory_space<vmem>>, %arg5: memref<1x32xf32, #tpu.memory_space<vmem>>, %arg6: memref<16x32xf32, #tpu.memory_space<vmem>>, %arg7: memref<16x32xf32, #tpu.memory_space<vmem>>) attributes {dimension_semantics = [#tpu.dimension_semantics<parallel>, #tpu.dimension_semantics<parallel>, #tpu.dimension_semantics<arbitrary>], iteration_bounds = array<i64: 1, 1, 1>, scalar_prefetch = 0 : i64, scratch_operands = 1 : i64, tpu.core_type = #tpu.core_type<tc>, window_params = [{transform_indices = @transform_0, window_bounds = array<i64: 16, 32>}, {transform_indices = @transform_1, window_bounds = array<i64: 32, 32>}, {transform_indices = @transform_2, window_bounds = array<i64: 1, 32>}, {transform_indices = @transform_3, window_bounds = array<i64: 16, 32>}]} {
    %c0_i32 = arith.constant 0 : i32
    %0 = arith.cmpi eq, %arg2, %c0_i32 : i32
    %1 = arith.extui %0 : i1 to i32
    %c0_i32_0 = arith.constant 0 : i32
    %2 = arith.cmpi ne, %1, %c0_i32_0 : i32
    scf.if %2 {
      %cst_10 = arith.constant 0.000000e+00 : f32
      %12 = vector.broadcast %cst_10 : f32 to vector<16x32xf32>
      %c0_11 = arith.constant 0 : index
      %c0_12 = arith.constant 0 : index
      %13 = vector.load %arg7[%c0_11, %c0_12] : memref<16x32xf32, #tpu.memory_space<vmem>>, vector<16x32xf32>
      tpu.vector_store %arg7[%c0_11, %c0_12], %12 {strides = array<i32>} : memref<16x32xf32, #tpu.memory_space<vmem>>, vector<16x32xf32>,
    } else {
    }
    %c0 = arith.constant 0 : index
    %c0_1 = arith.constant 0 : index
    %3 = vector.load %arg7[%c0, %c0_1] : memref<16x32xf32, #tpu.memory_space<vmem>>, vector<16x32xf32>
    %c0_2 = arith.constant 0 : index
    %c0_3 = arith.constant 0 : index
    %4 = vector.load %arg3[%c0_2, %c0_3] : memref<16x32xf32, #tpu.memory_space<vmem>>, vector<16x32xf32>
    %c0_4 = arith.constant 0 : index
    %c0_5 = arith.constant 0 : index
    %5 = vector.load %arg4[%c0_4, %c0_5] : memref<32x32xf32, #tpu.memory_space<vmem>>, vector<32x32xf32>
    %cst = arith.constant dense<0.000000e+00> : vector<16x32xf32>
    %6 = tpu.matmul %4, %5, %cst {dimension_numbers = #tpu.dot_dimension_numbers<[1], [1], [0], [0], [0, 0, 1, 0], [], []>} : vector<16x32xf32>, vector<32x32xf32>, vector<16x32xf32> -> vector<16x32xf32>
    %7 = arith.addf %3, %6 : vector<16x32xf32>
    %c0_6 = arith.constant 0 : index
    %c0_7 = arith.constant 0 : index
    %8 = vector.load %arg7[%c0_6, %c0_7] : memref<16x32xf32, #tpu.memory_space<vmem>>, vector<16x32xf32>
    tpu.vector_store %arg7[%c0_6, %c0_7], %7 {strides = array<i32>} : memref<16x32xf32, #tpu.memory_space<vmem>>, vector<16x32xf32>,
    %c0_i32_8 = arith.constant 0 : i32
    %9 = arith.cmpi eq, %arg2, %c0_i32_8 : i32
    %10 = arith.extui %9 : i1 to i32
    %c0_i32_9 = arith.constant 0 : i32
    %11 = arith.cmpi ne, %10, %c0_i32_9 : i32
    scf.if %11 {
      %c0_10 = arith.constant 0 : index
      %c0_11 = arith.constant 0 : index
      %12 = vector.load %arg7[%c0_10, %c0_11] : memref<16x32xf32, #tpu.memory_space<vmem>>, vector<16x32xf32>
      %c0_12 = arith.constant 0 : index
      %c0_13 = arith.constant 0 : index
      %13 = vector.load %arg5[%c0_12, %c0_13] : memref<1x32xf32, #tpu.memory_space<vmem>>, vector<1x32xf32>
      %14 = vector.broadcast %13 : vector<1x32xf32> to vector<16x32xf32>
      %15 = arith.addf %12, %14 : vector<16x32xf32>
      %c0_14 = arith.constant 0 : index
      %c0_15 = arith.constant 0 : index
      %16 = vector.load %arg6[%c0_14, %c0_15] : memref<16x32xf32, #tpu.memory_space<vmem>>, vector<16x32xf32>
      tpu.vector_store %arg6[%c0_14, %c0_15], %15 {strides = array<i32>} : memref<16x32xf32, #tpu.memory_space<vmem>>, vector<16x32xf32>,
    } else {
    }
    return
  }
  func.func @transform_0(%arg0: i32, %arg1: i32, %arg2: i32) -> (i32, i32) {
    %c0_i32 = arith.constant 0 : i32
    return %arg0, %arg2 : i32, i32
  }
  func.func @transform_1(%arg0: i32, %arg1: i32, %arg2: i32) -> (i32, i32) {
    %c0_i32 = arith.constant 0 : i32
    return %arg1, %arg2 : i32, i32
  }
  func.func @transform_2(%arg0: i32, %arg1: i32, %arg2: i32) -> (i32, i32) {
    %c0_i32 = arith.constant 0 : i32
    %c0_i32_0 = arith.constant 0 : i32
    return %c0_i32, %arg1 : i32, i32
  }
  func.func @transform_3(%arg0: i32, %arg1: i32, %arg2: i32) -> (i32, i32) {
    %c0_i32 = arith.constant 0 : i32
    return %arg0, %arg1 : i32, i32
  }
}

</mosaic_0001>

<llo_original>
// kernel: multi_head_attention.6
$region0: #{multi_head_attention.6}
  #allocation0 [shape = 'u32[]', space=smem, size = 0x4, offset = 0x4, fixed_abs, tag = 'smem constant byte address 0x4 - core index']
  #allocation1 [shape = 'u32[144,128]{1,0:T(1,128)}', space=vmem, size = 0x12000, scoped, tag = 'internal scratch']
  #allocation2 [shape = 'f32[16,32]{1,0:T(8,128)}', space=vmem, size = 0x2000, scoped, tag = 'scratch operand']
  %s0 = inlined_call_operand.vmem [shape: f32[16,32], index: 0, kind: input, shape index: {}]
  %s1 = inlined_call_operand.hbm [shape: f32[32,32], index: 1, kind: input, shape index: {}]
  %s2 = inlined_call_operand.vmem [shape: f32[1,32], index: 2, kind: input, shape index: {}]
  %s3 = inlined_call_operand.vmem [shape: f32[16,32], index: 3, kind: output, shape index: {}]
  %s4 = sld [smem:[#allocation0]]
  $region34: #{multi_head_attention.6} parent=0
    _
  %s6 = ssub.s32 1, %s4
  %s7 = scalar_select 0, %s6, %s4
  $region1: #{multi_head_attention.6} parent=0
    #allocation3 [shape = 'u8[16384]{0}', space=vmem, size = 0x4000, scoped, tag = 'input window, operand 1, single buffered']
    #allocation4 [shape = 's32[1]{0}', space=sflag, size = 0x4, scoped, tag = 'scoped memory for multi_head_attention.6']
    %8 = vsyncpa [#allocation4], 0
    // Predicated region
    $region2: #{multi_head_attention.6} parent=1 // pred_check
      _
    $region3: #{multi_head_attention.6} parent=1 // pred_check_branch
      %10 = sbr.rel (0) target = $region5
    $region4: #{multi_head_attention.6} parent=1 // pred_region
      _
    $region5: #{multi_head_attention.6} parent=1 // pred_fallthru
      _
    // Predicated region
    $region6: #{multi_head_attention.6} parent=1 // pred_check
      _
    $region7: #{multi_head_attention.6} parent=1 // pred_check_branch
      %12 = sbr.rel (0) target = $region9
    $region8: #{multi_head_attention.6} parent=1 // pred_region
      %s14 = ssub.s32 512, 512
      %15 = vsyncadd [#allocation4], %s14
      %s16 = sshll.u32 [#allocation3], 4
      %s17 = int_to_ptr.vmem [resolvable:$true] %s16
      %22 = dma.hbm_to_vmem [thread:$0]  %s1, 512, %s17, [#allocation4], 128, 128, 8
    $region9: #{multi_head_attention.6} parent=1 // pred_fallthru
      _
    // Predicated region
    $region10: #{multi_head_attention.6} parent=1 // pred_check
      _
    $region11: #{multi_head_attention.6} parent=1 // pred_check_branch
      %24 = sbr.rel (0) target = $region13
    $region12: #{multi_head_attention.6} parent=1 // pred_region
      _
    $region13: #{multi_head_attention.6} parent=1 // pred_fallthru
      _
    // Predicated region
    $region14: #{multi_head_attention.6} parent=1 // pred_check
      _
    $region15: #{multi_head_attention.6} parent=1 // pred_check_branch
      %26 = sbr.rel (0) target = $region17
    $region16: #{multi_head_attention.6} parent=1 // pred_region
      %27 = dma.done [#allocation4], 512
    $region17: #{multi_head_attention.6} parent=1 // pred_fallthru
      _
    %p28 = scmp.eq.s32.totalorder 0, 0
    // Predicated region
    $region18: #{multi_head_attention.6} parent=1 // pred_check
      %p29 = pneg %p28
    $region19: #{multi_head_attention.6} parent=1 // pred_check_branch
      %31 = sbr.rel (%p29) target = $region21
    $region20: #{multi_head_attention.6} parent=1 // pred_region
      %vm32 = vcmask 261120
      %33 = vst.msk [vmem:[#allocation2] sm:$0xff] %vm32, 0.0
      %34 = vst.msk [vmem:[#allocation2 + $0x8] sm:$0xff] %vm32, 0.0
    $region21: #{multi_head_attention.6} parent=1 // pred_fallthru
      _
    %v35 = vld [vmem:[#allocation2] sm:$0xff]
    %v36 = vld [vmem:[#allocation2 + $0x8] sm:$0xff]
    %v37 = vld [vmem:[%s0] sm:$0xff]
    %v38 = vld [vmem:[%s0 + $0x8] sm:$0xff]
    %v39 = vld [vmem:[#allocation3] sm:$0xff]
    %v40 = vld [vmem:[#allocation3 + $0x8] sm:$0xff]
    %v41 = vld [vmem:[#allocation3 + $0x10] sm:$0xff]
    %v42 = vld [vmem:[#allocation3 + $0x18] sm:$0xff]
    %vm43 = vcmask 261120
    %v45 = vsel %vm43, %v37, 0
    %v48 = vsel %vm43, %v38, 0
    %v51 = vsel %vm43, %v39, 0
    %v54 = vsel %vm43, %v40, 0
    %v57 = vsel %vm43, %v41, 0
    %v60 = vsel %vm43, %v42, 0
    %62 = vmatprep.subr.mxu0 0.0
    %63 = vmatpush1.xpose.msra.mxu0 0.0
    %64 = vmatprep.subr.mxu0 0.0
    %65 = vmatpush1.xpose.msra.mxu0 0.0
    %66 = vmatprep.subr.mxu0 0.0
    %67 = vmatpush1.xpose.msra.mxu0 0.0
    %68 = vmatprep.subr.mxu0 0.0
    %69 = vmatpush1.xpose.msra.mxu0 0.0
    %70 = vmatprep.subr.mxu0 0.0
    %71 = vmatpush1.xpose.msra.mxu0 0.0
    %72 = vmatprep.subr.mxu0 0.0
    %73 = vmatpush1.xpose.msra.mxu0 0.0
    %74 = vmatprep.subr.mxu0 0.0
    %75 = vmatpush1.xpose.msra.mxu0 0.0
    %76 = vmatprep.subr.mxu0 0.0
    %77 = vmatpush1.xpose.msra.mxu0 0.0
    %78 = vmatprep.subr.mxu0 0.0
    %79 = vmatpush1.xpose.msra.mxu0 0.0
    %80 = vmatprep.subr.mxu0 0.0
    %81 = vmatpush1.xpose.msra.mxu0 0.0
    %82 = vmatprep.subr.mxu0 0.0
    %83 = vmatpush1.xpose.msra.mxu0 0.0
    %84 = vmatprep.subr.mxu0 0.0
    %85 = vmatpush1.xpose.msra.mxu0 0.0
    %86 = vmatprep.subr.mxu0 0.0
    %87 = vmatpush1.xpose.msra.mxu0 %v60
    %88 = vmatprep.subr.mxu0 0.0
    %89 = vmatpush1.xpose.msra.mxu0 %v57
    %90 = vmatprep.subr.mxu0 0.0
    %91 = vmatpush1.xpose.msra.mxu0 %v54
    %92 = vmatprep.subr.mxu0 0.0
    %93 = vmatpush1.xpose.msra.mxu0 %v51
    %94 = vmatprep.subr.mxu0 0.0
    %95 = vmatpush2.xpose.msra.mxu0 0.0
    %96 = vmatprep.subr.mxu0 0.0
    %97 = vmatpush2.xpose.msra.mxu0 0.0
    %98 = vmatprep.subr.mxu0 0.0
    %99 = vmatpush2.xpose.msra.mxu0 0.0
    %100 = vmatprep.subr.mxu0 0.0
    %101 = vmatpush2.xpose.msra.mxu0 0.0
    %102 = vmatprep.subr.mxu0 0.0
    %103 = vmatpush2.xpose.msra.mxu0 0.0
    %104 = vmatprep.subr.mxu0 0.0
    %105 = vmatpush2.xpose.msra.mxu0 0.0
    %106 = vmatprep.subr.mxu0 0.0
    %107 = vmatpush2.xpose.msra.mxu0 0.0
    %108 = vmatprep.subr.mxu0 0.0
    %109 = vmatpush2.xpose.msra.mxu0 0.0
    %110 = vmatprep.subr.mxu0 0.0
    %111 = vmatpush2.xpose.msra.mxu0 0.0
    %112 = vmatprep.subr.mxu0 0.0
    %113 = vmatpush2.xpose.msra.mxu0 0.0
    %114 = vmatprep.subr.mxu0 0.0
    %115 = vmatpush2.xpose.msra.mxu0 0.0
    %116 = vmatprep.subr.mxu0 0.0
    %117 = vmatpush2.xpose.msra.mxu0 0.0
    %118 = vmatprep.subr.mxu0 0.0
    %119 = vmatpush2.xpose.msra.mxu0 0.0
    %120 = vmatprep.subr.mxu0 0.0
    %121 = vmatpush2.xpose.msra.mxu0 0.0
    %122 = vmatprep.subr.mxu0 0.0
    %123 = vmatpush2.xpose.msra.mxu0 0.0
    %124 = vmatprep.subr.mxu0 0.0
    %125 = vmatpush2.xpose.msra.mxu0 0.0
    %126 = vmatprep.mubr.f32.mxu0 0.0
    %127 = vmatmul.mubr.f32.gmra.mxu0 %v45
    %v128 = vpop.f32.mrf.mxu0
    %v129 = vadd.f32 0.0, %v128
    %v130 = vpop.f32.mrf.mxu0
    %131 = vmatprep.mubr.f32.mxu0 0.0
    %132 = vmatmul.mubr.f32.gmra.mxu0 %v48
    %v133 = vpop.f32.mrf.mxu0
    %v134 = vadd.f32 0.0, %v133
    %v135 = vpop.f32.mrf.mxu0
    %136 = vdwg.mxu0
    %v137 = vadd.f32 %v35, %v129
    %v138 = vadd.f32 %v36, %v134
    %139 = vst.msk [vmem:[#allocation2] sm:$0xff] %vm43, %v137
    %140 = vst.msk [vmem:[#allocation2 + $0x8] sm:$0xff] %vm43, %v138
    // Predicated region
    $region22: #{multi_head_attention.6} parent=1 // pred_check
      %p141 = pneg %p28
    $region23: #{multi_head_attention.6} parent=1 // pred_check_branch
      %143 = sbr.rel (%p141) target = $region25
    $region24: #{multi_head_attention.6} parent=1 // pred_region
      %v144 = vld [vmem:[#allocation2] sm:$0xff]
      %v145 = vld [vmem:[#allocation2 + $0x8] sm:$0xff]
      %v146 = vld [vmem:[%s2] sm:$0x1]
      %v148 = vlaneseq
      %v149 = vshrl.u32 %v148, 7
      %v150 = vsub.s32 0, %v149
      %v151 = vrot.slane %v146, %v150
      %v153 = vadd.f32 %v144, %v151
      %v154 = vadd.f32 %v145, %v151
      %155 = vst.msk [vmem:[%s3] sm:$0xff] %vm43, %v153
      %156 = vst.msk [vmem:[%s3 + $0x8] sm:$0xff] %vm43, %v154
    $region25: #{multi_head_attention.6} parent=1 // pred_fallthru
      _
    // Predicated region
    $region26: #{multi_head_attention.6} parent=1 // pred_check
      _
    $region27: #{multi_head_attention.6} parent=1 // pred_check_branch
      %158 = sbr.rel (0) target = $region29
    $region28: #{multi_head_attention.6} parent=1 // pred_region
      _
    $region29: #{multi_head_attention.6} parent=1 // pred_fallthru
      _
    // Predicated region
    $region30: #{multi_head_attention.6} parent=1 // pred_check
      _
    $region31: #{multi_head_attention.6} parent=1 // pred_check_branch
      %160 = sbr.rel (0) target = $region33
    $region32: #{multi_head_attention.6} parent=1 // pred_region
      _
    $region33: #{multi_head_attention.6} parent=1 // pred_fallthru
      _
    %161 = vsyncpa [#allocation4], 1

// kernel: multi_head_attention.5
$region0: #{multi_head_attention.5}
  #allocation0 [shape = 'u32[]', space=smem, size = 0x4, offset = 0x4, fixed_abs, tag = 'smem constant byte address 0x4 - core index']
  #allocation1 [shape = 'u32[144,128]{1,0:T(1,128)}', space=vmem, size = 0x12000, scoped, tag = 'internal scratch']
  #allocation2 [shape = 'f32[16,32]{1,0:T(8,128)}', space=vmem, size = 0x2000, scoped, tag = 'scratch operand']
  %s0 = inlined_call_operand.vmem [shape: f32[16,32], index: 0, kind: input, shape index: {}]
  %s1 = inlined_call_operand.vmem [shape: f32[32,32], index: 1, kind: input, shape index: {}]
  %s2 = inlined_call_operand.vmem [shape: f32[1,32], index: 2, kind: input, shape index: {}]
  %s3 = inlined_call_operand.vmem [shape: f32[16,32], index: 3, kind: output, shape index: {}]
  %s4 = sld [smem:[#allocation0]]
  $region30: #{multi_head_attention.5} parent=0
    _
  %s6 = ssub.s32 1, %s4
  %s7 = scalar_select 0, %s6, %s4
  // Predicated region
  $region2: #{multi_head_attention.5} parent=0 // pred_check
    _
  $region3: #{multi_head_attention.5} parent=0 // pred_check_branch
    %9 = sbr.rel (0) target = $region5
  $region4: #{multi_head_attention.5} parent=0 // pred_region
    _
  $region5: #{multi_head_attention.5} parent=0 // pred_fallthru
    _
  // Predicated region
  $region6: #{multi_head_attention.5} parent=0 // pred_check
    _
  $region7: #{multi_head_attention.5} parent=0 // pred_check_branch
    %11 = sbr.rel (0) target = $region9
  $region8: #{multi_head_attention.5} parent=0 // pred_region
    _
  $region9: #{multi_head_attention.5} parent=0 // pred_fallthru
    _
  // Predicated region
  $region10: #{multi_head_attention.5} parent=0 // pred_check
    _
  $region11: #{multi_head_attention.5} parent=0 // pred_check_branch
    %13 = sbr.rel (0) target = $region13
  $region12: #{multi_head_attention.5} parent=0 // pred_region
    _
  $region13: #{multi_head_attention.5} parent=0 // pred_fallthru
    _
  %p14 = scmp.eq.s32.totalorder 0, 0
  // Predicated region
  $region14: #{multi_head_attention.5} parent=0 // pred_check
    %p15 = pneg %p14
  $region15: #{multi_head_attention.5} parent=0 // pred_check_branch
    %17 = sbr.rel (%p15) target = $region17
  $region16: #{multi_head_attention.5} parent=0 // pred_region
    %vm18 = vcmask 261120
    %19 = vst.msk [vmem:[#allocation2] sm:$0xff] %vm18, 0.0
    %20 = vst.msk [vmem:[#allocation2 + $0x8] sm:$0xff] %vm18, 0.0
  $region17: #{multi_head_attention.5} parent=0 // pred_fallthru
    _
  %v21 = vld [vmem:[#allocation2] sm:$0xff]
  %v22 = vld [vmem:[#allocation2 + $0x8] sm:$0xff]
  %v23 = vld [vmem:[%s0] sm:$0xff]
  %v24 = vld [vmem:[%s0 + $0x8] sm:$0xff]
  %v25 = vld [vmem:[%s1] sm:$0xff]
  %v26 = vld [vmem:[%s1 + $0x8] sm:$0xff]
  %v27 = vld [vmem:[%s1 + $0x10] sm:$0xff]
  %v28 = vld [vmem:[%s1 + $0x18] sm:$0xff]
  %vm29 = vcmask 261120
  %v31 = vsel %vm29, %v23, 0
  %v34 = vsel %vm29, %v24, 0
  %v37 = vsel %vm29, %v25, 0
  %v40 = vsel %vm29, %v26, 0
  %v43 = vsel %vm29, %v27, 0
  %v46 = vsel %vm29, %v28, 0
  %48 = vmatprep.subr.mxu0 0.0
  %49 = vmatpush1.xpose.msra.mxu0 0.0
  %50 = vmatprep.subr.mxu0 0.0
  %51 = vmatpush1.xpose.msra.mxu0 0.0
  %52 = vmatprep.subr.mxu0 0.0
  %53 = vmatpush1.xpose.msra.mxu0 0.0
  %54 = vmatprep.subr.mxu0 0.0
  %55 = vmatpush1.xpose.msra.mxu0 0.0
  %56 = vmatprep.subr.mxu0 0.0
  %57 = vmatpush1.xpose.msra.mxu0 0.0
  %58 = vmatprep.subr.mxu0 0.0
  %59 = vmatpush1.xpose.msra.mxu0 0.0
  %60 = vmatprep.subr.mxu0 0.0
  %61 = vmatpush1.xpose.msra.mxu0 0.0
  %62 = vmatprep.subr.mxu0 0.0
  %63 = vmatpush1.xpose.msra.mxu0 0.0
  %64 = vmatprep.subr.mxu0 0.0
  %65 = vmatpush1.xpose.msra.mxu0 0.0
  %66 = vmatprep.subr.mxu0 0.0
  %67 = vmatpush1.xpose.msra.mxu0 0.0
  %68 = vmatprep.subr.mxu0 0.0
  %69 = vmatpush1.xpose.msra.mxu0 0.0
  %70 = vmatprep.subr.mxu0 0.0
  %71 = vmatpush1.xpose.msra.mxu0 0.0
  %72 = vmatprep.subr.mxu0 0.0
  %73 = vmatpush1.xpose.msra.mxu0 %v46
  %74 = vmatprep.subr.mxu0 0.0
  %75 = vmatpush1.xpose.msra.mxu0 %v43
  %76 = vmatprep.subr.mxu0 0.0
  %77 = vmatpush1.xpose.msra.mxu0 %v40
  %78 = vmatprep.subr.mxu0 0.0
  %79 = vmatpush1.xpose.msra.mxu0 %v37
  %80 = vmatprep.subr.mxu0 0.0
  %81 = vmatpush2.xpose.msra.mxu0 0.0
  %82 = vmatprep.subr.mxu0 0.0
  %83 = vmatpush2.xpose.msra.mxu0 0.0
  %84 = vmatprep.subr.mxu0 0.0
  %85 = vmatpush2.xpose.msra.mxu0 0.0
  %86 = vmatprep.subr.mxu0 0.0
  %87 = vmatpush2.xpose.msra.mxu0 0.0
  %88 = vmatprep.subr.mxu0 0.0
  %89 = vmatpush2.xpose.msra.mxu0 0.0
  %90 = vmatprep.subr.mxu0 0.0
  %91 = vmatpush2.xpose.msra.mxu0 0.0
  %92 = vmatprep.subr.mxu0 0.0
  %93 = vmatpush2.xpose.msra.mxu0 0.0
  %94 = vmatprep.subr.mxu0 0.0
  %95 = vmatpush2.xpose.msra.mxu0 0.0
  %96 = vmatprep.subr.mxu0 0.0
  %97 = vmatpush2.xpose.msra.mxu0 0.0
  %98 = vmatprep.subr.mxu0 0.0
  %99 = vmatpush2.xpose.msra.mxu0 0.0
  %100 = vmatprep.subr.mxu0 0.0
  %101 = vmatpush2.xpose.msra.mxu0 0.0
  %102 = vmatprep.subr.mxu0 0.0
  %103 = vmatpush2.xpose.msra.mxu0 0.0
  %104 = vmatprep.subr.mxu0 0.0
  %105 = vmatpush2.xpose.msra.mxu0 0.0
  %106 = vmatprep.subr.mxu0 0.0
  %107 = vmatpush2.xpose.msra.mxu0 0.0
  %108 = vmatprep.subr.mxu0 0.0
  %109 = vmatpush2.xpose.msra.mxu0 0.0
  %110 = vmatprep.subr.mxu0 0.0
  %111 = vmatpush2.xpose.msra.mxu0 0.0
  %112 = vmatprep.mubr.f32.mxu0 0.0
  %113 = vmatmul.mubr.f32.gmra.mxu0 %v31
  %v114 = vpop.f32.mrf.mxu0
  %v115 = vadd.f32 0.0, %v114
  %v116 = vpop.f32.mrf.mxu0
  %117 = vmatprep.mubr.f32.mxu0 0.0
  %118 = vmatmul.mubr.f32.gmra.mxu0 %v34
  %v119 = vpop.f32.mrf.mxu0
  %v120 = vadd.f32 0.0, %v119
  %v121 = vpop.f32.mrf.mxu0
  %122 = vdwg.mxu0
  %v123 = vadd.f32 %v21, %v115
  %v124 = vadd.f32 %v22, %v120
  %125 = vst.msk [vmem:[#allocation2] sm:$0xff] %vm29, %v123
  %126 = vst.msk [vmem:[#allocation2 + $0x8] sm:$0xff] %vm29, %v124
  // Predicated region
  $region18: #{multi_head_attention.5} parent=0 // pred_check
    %p127 = pneg %p14
  $region19: #{multi_head_attention.5} parent=0 // pred_check_branch
    %129 = sbr.rel (%p127) target = $region21
  $region20: #{multi_head_attention.5} parent=0 // pred_region
    %v130 = vld [vmem:[#allocation2] sm:$0xff]
    %v131 = vld [vmem:[#allocation2 + $0x8] sm:$0xff]
    %v132 = vld [vmem:[%s2] sm:$0x1]
    %v134 = vlaneseq
    %v135 = vshrl.u32 %v134, 7
    %v136 = vsub.s32 0, %v135
    %v137 = vrot.slane %v132, %v136
    %v139 = vadd.f32 %v130, %v137
    %v140 = vadd.f32 %v131, %v137
    %141 = vst.msk [vmem:[%s3] sm:$0xff] %vm29, %v139
    %142 = vst.msk [vmem:[%s3 + $0x8] sm:$0xff] %vm29, %v140
  $region21: #{multi_head_attention.5} parent=0 // pred_fallthru
    _
  // Predicated region
  $region22: #{multi_head_attention.5} parent=0 // pred_check
    _
  $region23: #{multi_head_attention.5} parent=0 // pred_check_branch
    %144 = sbr.rel (0) target = $region25
  $region24: #{multi_head_attention.5} parent=0 // pred_region
    _
  $region25: #{multi_head_attention.5} parent=0 // pred_fallthru
    _
  // Predicated region
  $region26: #{multi_head_attention.5} parent=0 // pred_check
    _
  $region27: #{multi_head_attention.5} parent=0 // pred_check_branch
    %146 = sbr.rel (0) target = $region29
  $region28: #{multi_head_attention.5} parent=0 // pred_region
    _
  $region29: #{multi_head_attention.5} parent=0 // pred_fallthru
    _

// kernel: multi_head_attention.9
$region0: #{multi_head_attention.9}
  #allocation0 [shape = 'u32[]', space=smem, size = 0x4, offset = 0x4, fixed_abs, tag = 'smem constant byte address 0x4 - core index']
  #allocation1 [shape = 'u32[144,128]{1,0:T(1,128)}', space=vmem, size = 0x12000, scoped, tag = 'internal scratch']
  #allocation2 [shape = 'f32[16,32]{1,0:T(8,128)}', space=vmem, size = 0x2000, scoped, tag = 'scratch operand']
  %s0 = inlined_call_operand.vmem [shape: f32[16,32], index: 0, kind: input, shape index: {}]
  %s1 = inlined_call_operand.vmem [shape: f32[32,32], index: 1, kind: input, shape index: {}]
  %s2 = inlined_call_operand.vmem [shape: f32[1,32], index: 2, kind: input, shape index: {}]
  %s3 = inlined_call_operand.hbm [shape: f32[16,32], index: 3, kind: output, shape index: {}]
  %s4 = sld [smem:[#allocation0]]
  $region30: #{multi_head_attention.9} parent=0
    _
  %s6 = ssub.s32 1, %s4
  %s7 = scalar_select 0, %s6, %s4
  $region1: #{multi_head_attention.9} parent=0
    #allocation3 [shape = 'u8[8192]{0}', space=vmem, size = 0x2000, scoped, tag = 'output window, operand 0, single buffered']
    #allocation4 [shape = 's32[1]{0}', space=sflag, size = 0x4, scoped, tag = 'scoped memory for multi_head_attention.9']
    %8 = vsyncpa [#allocation4], 0
    // Predicated region
    $region2: #{multi_head_attention.9} parent=1 // pred_check
      _
    $region3: #{multi_head_attention.9} parent=1 // pred_check_branch
      %10 = sbr.rel (0) target = $region5
    $region4: #{multi_head_attention.9} parent=1 // pred_region
      _
    $region5: #{multi_head_attention.9} parent=1 // pred_fallthru
      _
    // Predicated region
    $region6: #{multi_head_attention.9} parent=1 // pred_check
      _
    $region7: #{multi_head_attention.9} parent=1 // pred_check_branch
      %12 = sbr.rel (0) target = $region9
    $region8: #{multi_head_attention.9} parent=1 // pred_region
      _
    $region9: #{multi_head_attention.9} parent=1 // pred_fallthru
      _
    // Predicated region
    $region10: #{multi_head_attention.9} parent=1 // pred_check
      _
    $region11: #{multi_head_attention.9} parent=1 // pred_check_branch
      %14 = sbr.rel (0) target = $region13
    $region12: #{multi_head_attention.9} parent=1 // pred_region
      _
    $region13: #{multi_head_attention.9} parent=1 // pred_fallthru
      _
    %p15 = scmp.eq.s32.totalorder 0, 0
    // Predicated region
    $region14: #{multi_head_attention.9} parent=1 // pred_check
      %p16 = pneg %p15
    $region15: #{multi_head_attention.9} parent=1 // pred_check_branch
      %18 = sbr.rel (%p16) target = $region17
    $region16: #{multi_head_attention.9} parent=1 // pred_region
      %vm19 = vcmask 261120
      %20 = vst.msk [vmem:[#allocation2] sm:$0xff] %vm19, 0.0
      %21 = vst.msk [vmem:[#allocation2 + $0x8] sm:$0xff] %vm19, 0.0
    $region17: #{multi_head_attention.9} parent=1 // pred_fallthru
      _
    %v22 = vld [vmem:[#allocation2] sm:$0xff]
    %v23 = vld [vmem:[#allocation2 + $0x8] sm:$0xff]
    %v24 = vld [vmem:[%s0] sm:$0xff]
    %v25 = vld [vmem:[%s0 + $0x8] sm:$0xff]
    %v26 = vld [vmem:[%s1] sm:$0xff]
    %v27 = vld [vmem:[%s1 + $0x8] sm:$0xff]
    %v28 = vld [vmem:[%s1 + $0x10] sm:$0xff]
    %v29 = vld [vmem:[%s1 + $0x18] sm:$0xff]
    %vm30 = vcmask 261120
    %v32 = vsel %vm30, %v24, 0
    %v35 = vsel %vm30, %v25, 0
    %v38 = vsel %vm30, %v26, 0
    %v41 = vsel %vm30, %v27, 0
    %v44 = vsel %vm30, %v28, 0
    %v47 = vsel %vm30, %v29, 0
    %49 = vmatprep.subr.mxu0 0.0
    %50 = vmatpush1.xpose.msra.mxu0 0.0
    %51 = vmatprep.subr.mxu0 0.0
    %52 = vmatpush1.xpose.msra.mxu0 0.0
    %53 = vmatprep.subr.mxu0 0.0
    %54 = vmatpush1.xpose.msra.mxu0 0.0
    %55 = vmatprep.subr.mxu0 0.0
    %56 = vmatpush1.xpose.msra.mxu0 0.0
    %57 = vmatprep.subr.mxu0 0.0
    %58 = vmatpush1.xpose.msra.mxu0 0.0
    %59 = vmatprep.subr.mxu0 0.0
    %60 = vmatpush1.xpose.msra.mxu0 0.0
    %61 = vmatprep.subr.mxu0 0.0
    %62 = vmatpush1.xpose.msra.mxu0 0.0
    %63 = vmatprep.subr.mxu0 0.0
    %64 = vmatpush1.xpose.msra.mxu0 0.0
    %65 = vmatprep.subr.mxu0 0.0
    %66 = vmatpush1.xpose.msra.mxu0 0.0
    %67 = vmatprep.subr.mxu0 0.0
    %68 = vmatpush1.xpose.msra.mxu0 0.0
    %69 = vmatprep.subr.mxu0 0.0
    %70 = vmatpush1.xpose.msra.mxu0 0.0
    %71 = vmatprep.subr.mxu0 0.0
    %72 = vmatpush1.xpose.msra.mxu0 0.0
    %73 = vmatprep.subr.mxu0 0.0
    %74 = vmatpush1.xpose.msra.mxu0 %v47
    %75 = vmatprep.subr.mxu0 0.0
    %76 = vmatpush1.xpose.msra.mxu0 %v44
    %77 = vmatprep.subr.mxu0 0.0
    %78 = vmatpush1.xpose.msra.mxu0 %v41
    %79 = vmatprep.subr.mxu0 0.0
    %80 = vmatpush1.xpose.msra.mxu0 %v38
    %81 = vmatprep.subr.mxu0 0.0
    %82 = vmatpush2.xpose.msra.mxu0 0.0
    %83 = vmatprep.subr.mxu0 0.0
    %84 = vmatpush2.xpose.msra.mxu0 0.0
    %85 = vmatprep.subr.mxu0 0.0
    %86 = vmatpush2.xpose.msra.mxu0 0.0
    %87 = vmatprep.subr.mxu0 0.0
    %88 = vmatpush2.xpose.msra.mxu0 0.0
    %89 = vmatprep.subr.mxu0 0.0
    %90 = vmatpush2.xpose.msra.mxu0 0.0
    %91 = vmatprep.subr.mxu0 0.0
    %92 = vmatpush2.xpose.msra.mxu0 0.0
    %93 = vmatprep.subr.mxu0 0.0
    %94 = vmatpush2.xpose.msra.mxu0 0.0
    %95 = vmatprep.subr.mxu0 0.0
    %96 = vmatpush2.xpose.msra.mxu0 0.0
    %97 = vmatprep.subr.mxu0 0.0
    %98 = vmatpush2.xpose.msra.mxu0 0.0
    %99 = vmatprep.subr.mxu0 0.0
    %100 = vmatpush2.xpose.msra.mxu0 0.0
    %101 = vmatprep.subr.mxu0 0.0
    %102 = vmatpush2.xpose.msra.mxu0 0.0
    %103 = vmatprep.subr.mxu0 0.0
    %104 = vmatpush2.xpose.msra.mxu0 0.0
    %105 = vmatprep.subr.mxu0 0.0
    %106 = vmatpush2.xpose.msra.mxu0 0.0
    %107 = vmatprep.subr.mxu0 0.0
    %108 = vmatpush2.xpose.msra.mxu0 0.0
    %109 = vmatprep.subr.mxu0 0.0
    %110 = vmatpush2.xpose.msra.mxu0 0.0
    %111 = vmatprep.subr.mxu0 0.0
    %112 = vmatpush2.xpose.msra.mxu0 0.0
    %113 = vmatprep.mubr.f32.mxu0 0.0
    %114 = vmatmul.mubr.f32.gmra.mxu0 %v32
    %v115 = vpop.f32.mrf.mxu0
    %v116 = vadd.f32 0.0, %v115
    %v117 = vpop.f32.mrf.mxu0
    %118 = vmatprep.mubr.f32.mxu0 0.0
    %119 = vmatmul.mubr.f32.gmra.mxu0 %v35
    %v120 = vpop.f32.mrf.mxu0
    %v121 = vadd.f32 0.0, %v120
    %v122 = vpop.f32.mrf.mxu0
    %123 = vdwg.mxu0
    %v124 = vadd.f32 %v22, %v116
    %v125 = vadd.f32 %v23, %v121
    %126 = vst.msk [vmem:[#allocation2] sm:$0xff] %vm30, %v124
    %127 = vst.msk [vmem:[#allocation2 + $0x8] sm:$0xff] %vm30, %v125
    // Predicated region
    $region18: #{multi_head_attention.9} parent=1 // pred_check
      %p128 = pneg %p15
    $region19: #{multi_head_attention.9} parent=1 // pred_check_branch
      %130 = sbr.rel (%p128) target = $region21
    $region20: #{multi_head_attention.9} parent=1 // pred_region
      %v131 = vld [vmem:[#allocation2] sm:$0xff]
      %v132 = vld [vmem:[#allocation2 + $0x8] sm:$0xff]
      %v133 = vld [vmem:[%s2] sm:$0x1]
      %v135 = vlaneseq
      %v136 = vshrl.u32 %v135, 7
      %v137 = vsub.s32 0, %v136
      %v138 = vrot.slane %v133, %v137
      %v140 = vadd.f32 %v131, %v138
      %v141 = vadd.f32 %v132, %v138
      %142 = vst.msk [vmem:[#allocation3] sm:$0xff] %vm30, %v140
      %143 = vst.msk [vmem:[#allocation3 + $0x8] sm:$0xff] %vm30, %v141
    $region21: #{multi_head_attention.9} parent=1 // pred_fallthru
      _
    // Predicated region
    $region22: #{multi_head_attention.9} parent=1 // pred_check
      _
    $region23: #{multi_head_attention.9} parent=1 // pred_check_branch
      %145 = sbr.rel (0) target = $region25
    $region24: #{multi_head_attention.9} parent=1 // pred_region
      %s147 = ssub.s32 256, 256
      %148 = vsyncadd [#allocation4], %s147
      %s149 = sshll.u32 [#allocation3], 4
      %s150 = int_to_ptr.vmem [resolvable:$true] %s149
      %155 = dma.vmem_to_hbm [thread:$0]  %s150, 256, %s3, [#allocation4], 128, 128, 8
    $region25: #{multi_head_attention.9} parent=1 // pred_fallthru
      _
    // Predicated region
    $region26: #{multi_head_attention.9} parent=1 // pred_check
      _
    $region27: #{multi_head_attention.9} parent=1 // pred_check_branch
      %157 = sbr.rel (0) target = $region29
    $region28: #{multi_head_attention.9} parent=1 // pred_region
      %158 = dma.done [#allocation4], 256
    $region29: #{multi_head_attention.9} parent=1 // pred_fallthru
      _
    %159 = vsyncpa [#allocation4], 1

// kernel: multi_head_attention.8
$region0: #{multi_head_attention.8}
  #allocation0 [shape = 'u32[]', space=smem, size = 0x4, offset = 0x4, fixed_abs, tag = 'smem constant byte address 0x4 - core index']
  #allocation1 [shape = 'u32[144,128]{1,0:T(1,128)}', space=vmem, size = 0x12000, scoped, tag = 'internal scratch']
  %s0 = inlined_call_operand.vmem [shape: f32[2,8,32], index: 0, kind: input, shape index: {}]
  %s1 = inlined_call_operand.vmem [shape: f32[2,8,32], index: 1, kind: input, shape index: {}]
  %s2 = inlined_call_operand.vmem [shape: f32[2,2,8,16], index: 2, kind: input, shape index: {}]
  %s3 = inlined_call_operand.hbm [shape: f32[2,2,8,8], index: 3, kind: output, shape index: {0}]
  %s4 = inlined_call_operand.vmem [shape: f32[2,8,32], index: 4, kind: output, shape index: {1}]
  %5 = xla_tuple %s3, %s4
  %s6 = sld [smem:[#allocation0]]
  $region53: #{multi_head_attention.8} parent=0
    _
  %s8 = ssub.s32 1, %s6
  %s9 = scalar_select 0, %s8, %s6
  $region1: #{multi_head_attention.8} parent=0
    #allocation2 [shape = 'u8[16384]{0}', space=vmem, size = 0x4000, scoped, tag = 'output window, operand 0']
    #allocation3 [shape = 's32[2]{0}', space=sflag, size = 0x8, scoped, tag = 'scoped memory for multi_head_attention.8']
    %10 = vsyncpa [#allocation3], 0
    %s11 = scalar_lea.sflag [#allocation3], 1
    %12 = vsyncpa %s11, 0
    loop: start=0, step=1, limit=4
    $region2: #{multi_head_attention.8} parent=1 // loop_pre_header
      _
    $region3: #{multi_head_attention.8} parent=1 // loop_header
      %s14 = sphi 0, %s18
      %p15 = scmp.ge.s32.totalorder %s14, 4
      %s21 = sphi 0, %s33
      %s22 = sphi 0, %s29
      %s23 = sphi 0, %s21
      %s24 = sphi 0, %s22
      %s25 = sphi 0, %s23
      %s26 = sphi 0, %s24
      %s38 = sphi 0, %s40
      %s41 = sphi 0, %s38
      %s42 = sphi 0, %s41
      %s58 = sphi 0, %s42
      %s64 = sphi 0, %s66
      %s67 = sphi 0, %s64
      %s68 = sphi 0, %s67
      %s84 = sphi 0, %s68
      %s90 = sphi 0, %s92
      %s93 = sphi 0, %s90
      %s94 = sphi 0, %s93
      %s110 = sphi 0, %s94
      %s118 = sphi 0, %s120
      %s121 = sphi 0, %s118
      %s122 = sphi 0, %s121
      %s138 = sphi 0, %s122
      %s146 = sphi 0, %s148
      %s149 = sphi 0, %s146
      %s150 = sphi 0, %s149
      %s166 = sphi 0, %s150
    $region4: #{multi_head_attention.8} parent=1 // loop_header_branch
      %17 = sbr.rel (%p15) target = $region8
    $region5: #{multi_head_attention.8} parent=1 // loop_body
      %s19 = ssub.s32 %s14, 1
      %s20 = ssub.s32 %s14, 2
      %s27 = sadd.s32 1, %s22
      %p28 = scmp.ge.s32.totalorder %s27, 2
      %s29 = scalar_select %p28, 0, %s27
      %s30 = sadd.s32 1, %s21
      %s31 = scalar_select %p28, %s30, %s21
      %p32 = scmp.ge.s32.totalorder %s31, 1
      %s33 = scalar_select %p32, 0, %s31
      %s34 = ssub.s32 %s22, %s29
      %s35 = ssub.s32 %s21, %s33
      %s36 = sor.u32 %s34, %s35
      %p37 = scmp.eq.s32.totalorder %s36, 0
      %s39 = sadd.s32 %s38, 1
      %s40 = scalar_select %p37, %s38, %s39
      %p43 = pneg %p37
      %p44 = scmp.eq.s32.totalorder %s14, 1
      %p45 = por %p43, %p44
      %p46 = scmp.ne.s32.totalorder %s38, %s41
      %p47 = scmp.eq.s32.totalorder %s14, 0
      %p48 = por %p46, %p47
      %p49 = scmp.ne.s32.totalorder %s38, %s41
      %p50 = scmp.eq.s32.totalorder %s19, 1
      %p51 = por %p49, %p50
      %p52 = scmp.ne.s32.totalorder %s41, %s42
      %p53 = scmp.eq.s32.totalorder %s19, 0
      %p54 = por %p52, %p53
      %p55 = scmp.ne.s32.totalorder %s41, %s42
      %p56 = scmp.eq.s32.totalorder %s20, 1
      %p57 = por %p55, %p56
      %p59 = scmp.ne.s32.totalorder %s42, %s58
      %p60 = scmp.eq.s32.totalorder %s20, 0
      %p61 = por %p59, %p60
      %s62 = ssub.s32 %s22, %s29
      %p63 = scmp.eq.s32.totalorder %s62, 0
      %s65 = sadd.s32 %s64, 1
      %s66 = scalar_select %p63, %s64, %s65
      %p69 = pneg %p63
      %p70 = scmp.eq.s32.totalorder %s14, 1
      %p71 = por %p69, %p70
      %p72 = scmp.ne.s32.totalorder %s64, %s67
      %p73 = scmp.eq.s32.totalorder %s14, 0
      %p74 = por %p72, %p73
      %p75 = scmp.ne.s32.totalorder %s64, %s67
      %p76 = scmp.eq.s32.totalorder %s19, 1
      %p77 = por %p75, %p76
      %p78 = scmp.ne.s32.totalorder %s67, %s68
      %p79 = scmp.eq.s32.totalorder %s19, 0
      %p80 = por %p78, %p79
      %p81 = scmp.ne.s32.totalorder %s67, %s68
      %p82 = scmp.eq.s32.totalorder %s20, 1
      %p83 = por %p81, %p82
      %p85 = scmp.ne.s32.totalorder %s68, %s84
      %p86 = scmp.eq.s32.totalorder %s20, 0
      %p87 = por %p85, %p86
      %s88 = ssub.s32 %s22, %s29
      %p89 = scmp.eq.s32.totalorder %s88, 0
      %s91 = sadd.s32 %s90, 1
      %s92 = scalar_select %p89, %s90, %s91
      %p95 = pneg %p89
      %p96 = scmp.eq.s32.totalorder %s14, 1
      %p97 = por %p95, %p96
      %p98 = scmp.ne.s32.totalorder %s90, %s93
      %p99 = scmp.eq.s32.totalorder %s14, 0
      %p100 = por %p98, %p99
      %p101 = scmp.ne.s32.totalorder %s90, %s93
      %p102 = scmp.eq.s32.totalorder %s19, 1
      %p103 = por %p101, %p102
      %p104 = scmp.ne.s32.totalorder %s93, %s94
      %p105 = scmp.eq.s32.totalorder %s19, 0
      %p106 = por %p104, %p105
      %p107 = scmp.ne.s32.totalorder %s93, %s94
      %p108 = scmp.eq.s32.totalorder %s20, 1
      %p109 = por %p107, %p108
      %p111 = scmp.ne.s32.totalorder %s94, %s110
      %p112 = scmp.eq.s32.totalorder %s20, 0
      %p113 = por %p111, %p112
      %s114 = ssub.s32 %s22, %s29
      %s115 = ssub.s32 %s21, %s33
      %s116 = sor.u32 %s114, %s115
      %p117 = scmp.eq.s32.totalorder %s116, 0
      %s119 = sadd.s32 %s118, 1
      %s120 = scalar_select %p117, %s118, %s119
      %p123 = pneg %p117
      %p124 = scmp.eq.s32.totalorder %s14, 1
      %p125 = por %p123, %p124
      %p126 = scmp.ne.s32.totalorder %s118, %s121
      %p127 = scmp.eq.s32.totalorder %s14, 0
      %p128 = por %p126, %p127
      %p129 = scmp.ne.s32.totalorder %s118, %s121
      %p130 = scmp.eq.s32.totalorder %s19, 1
      %p131 = por %p129, %p130
      %p132 = scmp.ne.s32.totalorder %s121, %s122
      %p133 = scmp.eq.s32.totalorder %s19, 0
      %p134 = por %p132, %p133
      %p135 = scmp.ne.s32.totalorder %s121, %s122
      %p136 = scmp.eq.s32.totalorder %s20, 1
      %p137 = por %p135, %p136
      %p139 = scmp.ne.s32.totalorder %s122, %s138
      %p140 = scmp.eq.s32.totalorder %s20, 0
      %p141 = por %p139, %p140
      %s142 = ssub.s32 %s22, %s29
      %s143 = ssub.s32 %s21, %s33
      %s144 = sor.u32 %s142, %s143
      %p145 = scmp.eq.s32.totalorder %s144, 0
      %s147 = sadd.s32 %s146, 1
      %s148 = scalar_select %p145, %s146, %s147
      %p151 = pneg %p145
      %p152 = scmp.eq.s32.totalorder %s14, 1
      %p153 = por %p151, %p152
      %p154 = scmp.ne.s32.totalorder %s146, %s149
      %p155 = scmp.eq.s32.totalorder %s14, 0
      %p156 = por %p154, %p155
      %p157 = scmp.ne.s32.totalorder %s146, %s149
      %p158 = scmp.eq.s32.totalorder %s19, 1
      %p159 = por %p157, %p158
      %p160 = scmp.ne.s32.totalorder %s149, %s150
      %p161 = scmp.eq.s32.totalorder %s19, 0
      %p162 = por %p160, %p161
      %p163 = scmp.ne.s32.totalorder %s149, %s150
      %p164 = scmp.eq.s32.totalorder %s20, 1
      %p165 = por %p163, %p164
      %p167 = scmp.ne.s32.totalorder %s150, %s166
      %p168 = scmp.eq.s32.totalorder %s20, 0
      %p169 = por %p167, %p168
      %p170 = scmp.le.s32.totalorder 1, %s14
      %p171 = scmp.lt.s32.totalorder %s14, 3
      %p172 = pnand %p170, %p171
      %p173 = pneg %p172
      // Predicated region
      $region9: #{multi_head_attention.8} parent=5 // pred_check
        _
      $region10: #{multi_head_attention.8} parent=5 // pred_check_branch
        %175 = sbr.rel (%p172) target = $region12
      $region11: #{multi_head_attention.8} parent=5 // pred_region
        %s176 = ssub.s32 %s14, 1
      $region12: #{multi_head_attention.8} parent=5 // pred_fallthru
        _
      %p177 = scmp.lt.s32.totalorder %s14, 2
      // Predicated region
      $region13: #{multi_head_attention.8} parent=5 // pred_check
        %p178 = pneg %p177
      $region14: #{multi_head_attention.8} parent=5 // pred_check_branch
        %180 = sbr.rel (%p178) target = $region16
      $region15: #{multi_head_attention.8} parent=5 // pred_region
        // Predicated region
        $region17: #{multi_head_attention.8} parent=15 // pred_check
          %p181 = pneg %p48
        $region18: #{multi_head_attention.8} parent=15 // pred_check_branch
          %183 = sbr.rel (%p181) target = $region20
        $region19: #{multi_head_attention.8} parent=15 // pred_region
          %p184 = scmp.lt.s32.totalorder %s22, 1
          %s185 = scalar_select %p184, %s22, 1
          %p186 = scmp.lt.s32.totalorder %s21, 0
          %s187 = scalar_select %p186, %s21, 0
          %s188 = sadd.s32 %s187, %s185
          %s189 = smul.addr %s188, 8
          %s190 = scalar_lea.vmem %s0, %s189
        $region20: #{multi_head_attention.8} parent=15 // pred_fallthru
          _
        // Predicated region
        $region21: #{multi_head_attention.8} parent=15 // pred_check
          %p191 = pneg %p74
        $region22: #{multi_head_attention.8} parent=15 // pred_check_branch
          %193 = sbr.rel (%p191) target = $region24
        $region23: #{multi_head_attention.8} parent=15 // pred_region
          %p194 = scmp.lt.s32.totalorder %s22, 1
          %s195 = scalar_select %p194, %s22, 1
          %s196 = smul.addr %s195, 8
          %s197 = scalar_lea.vmem %s1, %s196
        $region24: #{multi_head_attention.8} parent=15 // pred_fallthru
          _
        // Predicated region
        $region25: #{multi_head_attention.8} parent=15 // pred_check
          %p198 = pneg %p100
        $region26: #{multi_head_attention.8} parent=15 // pred_check_branch
          %200 = sbr.rel (%p198) target = $region28
        $region27: #{multi_head_attention.8} parent=15 // pred_region
          %p201 = scmp.lt.s32.totalorder %s22, 1
          %s202 = scalar_select %p201, %s22, 1
          %s203 = smul.addr %s202, 2
          %s204 = smul.addr %s203, 8
          %s205 = scalar_lea.vmem %s2, %s204
        $region28: #{multi_head_attention.8} parent=15 // pred_fallthru
          _
      $region16: #{multi_head_attention.8} parent=5 // pred_fallthru
        _
      %p206 = scmp.le.s32.totalorder 1, %s14
      %p207 = scmp.lt.s32.totalorder %s14, 3
      %p208 = pnand %p206, %p207
      %p209 = pneg %p208
      // Predicated region
      $region29: #{multi_head_attention.8} parent=5 // pred_check
        _
      $region30: #{multi_head_attention.8} parent=5 // pred_check_branch
        %211 = sbr.rel (%p208) target = $region32
      $region31: #{multi_head_attention.8} parent=5 // pred_region
        %s212 = ssub.s32 %s14, 1
        %p213 = scmp.lt.s32.totalorder %s24, 1
        %s214 = scalar_select %p213, %s24, 1
        %p215 = scmp.lt.s32.totalorder %s23, 0
        %s216 = scalar_select %p215, %s23, 0
        %s217 = sadd.s32 %s216, %s214
        %s218 = smul.addr %s217, 8
        %s219 = scalar_lea.vmem %s0, %s218
        %p220 = pneg %p54
        %p221 = pneg %p51
        %p222 = scmp.lt.s32.totalorder %s24, 1
        %s223 = scalar_select %p222, %s24, 1
        %s224 = smul.addr %s223, 8
        %s225 = scalar_lea.vmem %s1, %s224
        %p226 = pneg %p80
        %p227 = pneg %p77
        %p228 = scmp.lt.s32.totalorder %s24, 1
        %s229 = scalar_select %p228, %s24, 1
        %s230 = smul.addr %s229, 2
        %s231 = smul.addr %s230, 8
        %s232 = scalar_lea.vmem %s2, %s231
        %p233 = pneg %p106
        %p234 = pneg %p103
        %p235 = pneg %p134
        %p236 = pneg %p131
        %s237 = sand.u32 %s121, 1
        %s238 = scalar_lea.sflag [#allocation3], %s237
        %s239 = sand.u32 %s121, 1
        %s240 = smul.addr %s239, 16
        %s241 = scalar_lea.vmem [#allocation2], %s240
        %p242 = pneg %p162
        %p243 = pneg %p159
        %p244 = scmp.lt.s32.totalorder %s24, 1
        %s245 = scalar_select %p244, %s24, 1
        %p246 = scmp.lt.s32.totalorder %s23, 0
        %s247 = scalar_select %p246, %s23, 0
        %s248 = sadd.s32 %s247, %s245
        %s249 = smul.addr %s248, 8
        %s250 = scalar_lea.vmem %s4, %s249
        %p251 = scmp.lt.s32.totalorder %s24, 1
        %s252 = scalar_select %p251, %s24, 1
        %p253 = scmp.lt.s32.totalorder %s23, 0
        %s254 = scalar_select %p253, %s23, 0
        %s255 = sadd.s32 %s254, %s252
        %s256 = smul.addr %s255, 8
        %s257 = scalar_lea.vmem %s0, %s256
        %p258 = scmp.lt.s32.totalorder %s24, 1
        %s259 = scalar_select %p258, %s24, 1
        %s260 = smul.addr %s259, 8
        %s261 = scalar_lea.vmem %s1, %s260
        %p262 = scmp.lt.s32.totalorder %s24, 1
        %s263 = scalar_select %p262, %s24, 1
        %s264 = smul.addr %s263, 2
        %s265 = smul.addr %s264, 8
        %s266 = scalar_lea.vmem %s2, %s265
        %p267 = scmp.lt.s32.totalorder %s24, 1
        %s268 = scalar_select %p267, %s24, 1
        %p269 = scmp.lt.s32.totalorder %s23, 0
        %s270 = scalar_select %p269, %s23, 0
        %s271 = sadd.s32 %s270, %s268
        %s272 = smul.addr %s271, 8
        %s273 = scalar_lea.vmem %s4, %s272
        %v274 = vld [vmem:[%s257] sm:$0xff]
        %v275 = vmul.f32 %v274, 0.70710677
        %v276 = vld [vmem:[%s261] sm:$0xff]
        %vm277 = vcmask 130048
        %v279 = vsel %vm277, %v275, 0
        %v282 = vsel %vm277, %v276, 0
        %284 = vmatprep.subr.mxu0 0.0
        %285 = vmatpush1.xpose.msra.mxu0 0.0
        %286 = vmatprep.subr.mxu0 0.0
        %287 = vmatpush1.xpose.msra.mxu0 0.0
        %288 = vmatprep.subr.mxu0 0.0
        %289 = vmatpush1.xpose.msra.mxu0 0.0
        %290 = vmatprep.subr.mxu0 0.0
        %291 = vmatpush1.xpose.msra.mxu0 0.0
        %292 = vmatprep.subr.mxu0 0.0
        %293 = vmatpush1.xpose.msra.mxu0 0.0
        %294 = vmatprep.subr.mxu0 0.0
        %295 = vmatpush1.xpose.msra.mxu0 0.0
        %296 = vmatprep.subr.mxu0 0.0
        %297 = vmatpush1.xpose.msra.mxu0 0.0
        %298 = vmatprep.subr.mxu0 0.0
        %299 = vmatpush1.xpose.msra.mxu0 0.0
        %300 = vmatprep.subr.mxu0 0.0
        %301 = vmatpush1.xpose.msra.mxu0 0.0
        %302 = vmatprep.subr.mxu0 0.0
        %303 = vmatpush1.xpose.msra.mxu0 0.0
        %304 = vmatprep.subr.mxu0 0.0
        %305 = vmatpush1.xpose.msra.mxu0 0.0
        %306 = vmatprep.subr.mxu0 0.0
        %307 = vmatpush1.xpose.msra.mxu0 0.0
        %308 = vmatprep.subr.mxu0 0.0
        %309 = vmatpush1.xpose.msra.mxu0 0.0
        %310 = vmatprep.subr.mxu0 0.0
        %311 = vmatpush1.xpose.msra.mxu0 0.0
        %312 = vmatprep.subr.mxu0 0.0
        %313 = vmatpush1.xpose.msra.mxu0 0.0
        %314 = vmatprep.subr.mxu0 0.0
        %315 = vmatpush1.xpose.msra.mxu0 %v282
        %316 = vmatprep.subr.mxu0 0.0
        %317 = vmatpush2.xpose.msra.mxu0 0.0
        %318 = vmatprep.subr.mxu0 0.0
        %319 = vmatpush2.xpose.msra.mxu0 0.0
        %320 = vmatprep.subr.mxu0 0.0
        %321 = vmatpush2.xpose.msra.mxu0 0.0
        %322 = vmatprep.subr.mxu0 0.0
        %323 = vmatpush2.xpose.msra.mxu0 0.0
        %324 = vmatprep.subr.mxu0 0.0
        %325 = vmatpush2.xpose.msra.mxu0 0.0
        %326 = vmatprep.subr.mxu0 0.0
        %327 = vmatpush2.xpose.msra.mxu0 0.0
        %328 = vmatprep.subr.mxu0 0.0
        %329 = vmatpush2.xpose.msra.mxu0 0.0
        %330 = vmatprep.subr.mxu0 0.0
        %331 = vmatpush2.xpose.msra.mxu0 0.0
        %332 = vmatprep.subr.mxu0 0.0
        %333 = vmatpush2.xpose.msra.mxu0 0.0
        %334 = vmatprep.subr.mxu0 0.0
        %335 = vmatpush2.xpose.msra.mxu0 0.0
        %336 = vmatprep.subr.mxu0 0.0
        %337 = vmatpush2.xpose.msra.mxu0 0.0
        %338 = vmatprep.subr.mxu0 0.0
        %339 = vmatpush2.xpose.msra.mxu0 0.0
        %340 = vmatprep.subr.mxu0 0.0
        %341 = vmatpush2.xpose.msra.mxu0 0.0
        %342 = vmatprep.subr.mxu0 0.0
        %343 = vmatpush2.xpose.msra.mxu0 0.0
        %344 = vmatprep.subr.mxu0 0.0
        %345 = vmatpush2.xpose.msra.mxu0 0.0
        %346 = vmatprep.subr.mxu0 0.0
        %347 = vmatpush2.xpose.msra.mxu0 0.0
        %348 = vmatprep.mubr.f32.mxu0 0.0
        %349 = vmatmul.mubr.f32.gmra.mxu0 %v279
        %v350 = vpop.f32.mrf.mxu0
        %v351 = vadd.f32 0.0, %v350
        %v352 = vpop.f32.mrf.mxu0
        %353 = vdwg.mxu0
        %vm354 = vcmask 64512
        %v355 = vsel %vm354, %v351, -inf
        %356 = vmax.xlane.f32.xlu0 %v355
        %v357 = vpop.xlane.xlu0 %356
        %v358 = vsub.f32 %v351, %v357
        %v359 = vmul.f32 %v358, 1.442695
        %v360 = vpow.pop %v359
        %v361 = vsel %vm354, %v360, 0.0
        %362 = vadd.xlane.f32.xlu0 %v361
        %v363 = vpop.xlane.xlu0 %362
        %v364 = vrcp.pop %v363
        %v365 = vmul.f32 %v360, %v364
        %366 = vst.msk [vmem:[%s241] sm:$0xff] %vm354, %v365
        %v367 = vld [vmem:[%s266] sm:$0xff]
        %v369 = vsel %vm354, %v365, 0
        %371 = vmatprep.subr.mxu0 0.0
        %372 = vmatpush1.msra.mxu0 0.0
        %373 = vmatprep.subr.mxu0 0.0
        %374 = vmatpush1.msra.mxu0 0.0
        %375 = vmatprep.subr.mxu0 0.0
        %376 = vmatpush1.msra.mxu0 0.0
        %377 = vmatprep.subr.mxu0 0.0
        %378 = vmatpush1.msra.mxu0 0.0
        %379 = vmatprep.subr.mxu0 0.0
        %380 = vmatpush1.msra.mxu0 0.0
        %381 = vmatprep.subr.mxu0 0.0
        %382 = vmatpush1.msra.mxu0 0.0
        %383 = vmatprep.subr.mxu0 0.0
        %384 = vmatpush1.msra.mxu0 0.0
        %385 = vmatprep.subr.mxu0 0.0
        %386 = vmatpush1.msra.mxu0 0.0
        %387 = vmatprep.subr.mxu0 0.0
        %388 = vmatpush1.msra.mxu0 0.0
        %389 = vmatprep.subr.mxu0 0.0
        %390 = vmatpush1.msra.mxu0 0.0
        %391 = vmatprep.subr.mxu0 0.0
        %392 = vmatpush1.msra.mxu0 0.0
        %393 = vmatprep.subr.mxu0 0.0
        %394 = vmatpush1.msra.mxu0 0.0
        %395 = vmatprep.subr.mxu0 0.0
        %396 = vmatpush1.msra.mxu0 0.0
        %397 = vmatprep.subr.mxu0 0.0
        %398 = vmatpush1.msra.mxu0 0.0
        %399 = vmatprep.subr.mxu0 0.0
        %400 = vmatpush1.msra.mxu0 0.0
        %401 = vmatprep.subr.mxu0 0.0
        %402 = vmatpush1.msra.mxu0 %v367
        %403 = vmatprep.subr.mxu0 0.0
        %404 = vmatpush2.msra.mxu0 0.0
        %405 = vmatprep.subr.mxu0 0.0
        %406 = vmatpush2.msra.mxu0 0.0
        %407 = vmatprep.subr.mxu0 0.0
        %408 = vmatpush2.msra.mxu0 0.0
        %409 = vmatprep.subr.mxu0 0.0
        %410 = vmatpush2.msra.mxu0 0.0
        %411 = vmatprep.subr.mxu0 0.0
        %412 = vmatpush2.msra.mxu0 0.0
        %413 = vmatprep.subr.mxu0 0.0
        %414 = vmatpush2.msra.mxu0 0.0
        %415 = vmatprep.subr.mxu0 0.0
        %416 = vmatpush2.msra.mxu0 0.0
        %417 = vmatprep.subr.mxu0 0.0
        %418 = vmatpush2.msra.mxu0 0.0
        %419 = vmatprep.subr.mxu0 0.0
        %420 = vmatpush2.msra.mxu0 0.0
        %421 = vmatprep.subr.mxu0 0.0
        %422 = vmatpush2.msra.mxu0 0.0
        %423 = vmatprep.subr.mxu0 0.0
        %424 = vmatpush2.msra.mxu0 0.0
        %425 = vmatprep.subr.mxu0 0.0
        %426 = vmatpush2.msra.mxu0 0.0
        %427 = vmatprep.subr.mxu0 0.0
        %428 = vmatpush2.msra.mxu0 0.0
        %429 = vmatprep.subr.mxu0 0.0
        %430 = vmatpush2.msra.mxu0 0.0
        %431 = vmatprep.subr.mxu0 0.0
        %432 = vmatpush2.msra.mxu0 0.0
        %433 = vmatprep.subr.mxu0 0.0
        %434 = vmatpush2.msra.mxu0 0.0
        %435 = vmatprep.mubr.f32.mxu0 0.0
        %436 = vmatmul.mubr.f32.gmra.mxu0 %v369
        %v437 = vpop.f32.mrf.mxu0
        %v438 = vadd.f32 0.0, %v437
        %v439 = vpop.f32.mrf.mxu0
        %440 = vdwg.mxu0
        %441 = vst.msk [vmem:[%s273] sm:$0xff] %vm277, %v438
        %v442 = vld [vmem:[%s257] sm:$0xff]
        %v443 = vmul.f32 %v442, 0.70710677
        %v444 = vld [vmem:[%s261] sm:$0xff]
        %446 = vrot.lane.b32.xlu0 %v443, 112
        %v447 = vpop.permute.xlu0 %446
        %449 = vrot.lane.b32.xlu0 %v444, 112
        %v450 = vpop.permute.xlu0 %449
        %v451 = vsel %vm277, %v447, 0
        %v453 = vsel %vm277, %v450, 0
        %455 = vmatprep.subr.mxu0 0.0
        %456 = vmatpush1.xpose.msra.mxu0 0.0
        %457 = vmatprep.subr.mxu0 0.0
        %458 = vmatpush1.xpose.msra.mxu0 0.0
        %459 = vmatprep.subr.mxu0 0.0
        %460 = vmatpush1.xpose.msra.mxu0 0.0
        %461 = vmatprep.subr.mxu0 0.0
        %462 = vmatpush1.xpose.msra.mxu0 0.0
        %463 = vmatprep.subr.mxu0 0.0
        %464 = vmatpush1.xpose.msra.mxu0 0.0
        %465 = vmatprep.subr.mxu0 0.0
        %466 = vmatpush1.xpose.msra.mxu0 0.0
        %467 = vmatprep.subr.mxu0 0.0
        %468 = vmatpush1.xpose.msra.mxu0 0.0
        %469 = vmatprep.subr.mxu0 0.0
        %470 = vmatpush1.xpose.msra.mxu0 0.0
        %471 = vmatprep.subr.mxu0 0.0
        %472 = vmatpush1.xpose.msra.mxu0 0.0
        %473 = vmatprep.subr.mxu0 0.0
        %474 = vmatpush1.xpose.msra.mxu0 0.0
        %475 = vmatprep.subr.mxu0 0.0
        %476 = vmatpush1.xpose.msra.mxu0 0.0
        %477 = vmatprep.subr.mxu0 0.0
        %478 = vmatpush1.xpose.msra.mxu0 0.0
        %479 = vmatprep.subr.mxu0 0.0
        %480 = vmatpush1.xpose.msra.mxu0 0.0
        %481 = vmatprep.subr.mxu0 0.0
        %482 = vmatpush1.xpose.msra.mxu0 0.0
        %483 = vmatprep.subr.mxu0 0.0
        %484 = vmatpush1.xpose.msra.mxu0 0.0
        %485 = vmatprep.subr.mxu0 0.0
        %486 = vmatpush1.xpose.msra.mxu0 %v453
        %487 = vmatprep.subr.mxu0 0.0
        %488 = vmatpush2.xpose.msra.mxu0 0.0
        %489 = vmatprep.subr.mxu0 0.0
        %490 = vmatpush2.xpose.msra.mxu0 0.0
        %491 = vmatprep.subr.mxu0 0.0
        %492 = vmatpush2.xpose.msra.mxu0 0.0
        %493 = vmatprep.subr.mxu0 0.0
        %494 = vmatpush2.xpose.msra.mxu0 0.0
        %495 = vmatprep.subr.mxu0 0.0
        %496 = vmatpush2.xpose.msra.mxu0 0.0
        %497 = vmatprep.subr.mxu0 0.0
        %498 = vmatpush2.xpose.msra.mxu0 0.0
        %499 = vmatprep.subr.mxu0 0.0
        %500 = vmatpush2.xpose.msra.mxu0 0.0
        %501 = vmatprep.subr.mxu0 0.0
        %502 = vmatpush2.xpose.msra.mxu0 0.0
        %503 = vmatprep.subr.mxu0 0.0
        %504 = vmatpush2.xpose.msra.mxu0 0.0
        %505 = vmatprep.subr.mxu0 0.0
        %506 = vmatpush2.xpose.msra.mxu0 0.0
        %507 = vmatprep.subr.mxu0 0.0
        %508 = vmatpush2.xpose.msra.mxu0 0.0
        %509 = vmatprep.subr.mxu0 0.0
        %510 = vmatpush2.xpose.msra.mxu0 0.0
        %511 = vmatprep.subr.mxu0 0.0
        %512 = vmatpush2.xpose.msra.mxu0 0.0
        %513 = vmatprep.subr.mxu0 0.0
        %514 = vmatpush2.xpose.msra.mxu0 0.0
        %515 = vmatprep.subr.mxu0 0.0
        %516 = vmatpush2.xpose.msra.mxu0 0.0
        %517 = vmatprep.subr.mxu0 0.0
        %518 = vmatpush2.xpose.msra.mxu0 0.0
        %519 = vmatprep.mubr.f32.mxu0 0.0
        %520 = vmatmul.mubr.f32.gmra.mxu0 %v451
        %v521 = vpop.f32.mrf.mxu0
        %v522 = vadd.f32 0.0, %v521
        %v523 = vpop.f32.mrf.mxu0
        %524 = vdwg.mxu0
        %v525 = vsel %vm354, %v522, -inf
        %526 = vmax.xlane.f32.xlu0 %v525
        %v527 = vpop.xlane.xlu0 %526
        %v528 = vsub.f32 %v522, %v527
        %v529 = vmul.f32 %v528, 1.442695
        %v530 = vpow.pop %v529
        %v531 = vsel %vm354, %v530, 0.0
        %532 = vadd.xlane.f32.xlu0 %v531
        %v533 = vpop.xlane.xlu0 %532
        %v534 = vrcp.pop %v533
        %v535 = vmul.f32 %v530, %v534
        %s536 = scalar_lea.vmem %s241, 8 [#allocation2]
        %537 = vst.msk [vmem:[%s536] sm:$0xff] %vm354, %v535
        %s538 = scalar_lea.vmem %s266, 8
        %v539 = vld [vmem:[%s538] sm:$0xff]
        %v541 = vsel %vm354, %v535, 0
        %543 = vmatprep.subr.mxu0 0.0
        %544 = vmatpush1.msra.mxu0 0.0
        %545 = vmatprep.subr.mxu0 0.0
        %546 = vmatpush1.msra.mxu0 0.0
        %547 = vmatprep.subr.mxu0 0.0
        %548 = vmatpush1.msra.mxu0 0.0
        %549 = vmatprep.subr.mxu0 0.0
        %550 = vmatpush1.msra.mxu0 0.0
        %551 = vmatprep.subr.mxu0 0.0
        %552 = vmatpush1.msra.mxu0 0.0
        %553 = vmatprep.subr.mxu0 0.0
        %554 = vmatpush1.msra.mxu0 0.0
        %555 = vmatprep.subr.mxu0 0.0
        %556 = vmatpush1.msra.mxu0 0.0
        %557 = vmatprep.subr.mxu0 0.0
        %558 = vmatpush1.msra.mxu0 0.0
        %559 = vmatprep.subr.mxu0 0.0
        %560 = vmatpush1.msra.mxu0 0.0
        %561 = vmatprep.subr.mxu0 0.0
        %562 = vmatpush1.msra.mxu0 0.0
        %563 = vmatprep.subr.mxu0 0.0
        %564 = vmatpush1.msra.mxu0 0.0
        %565 = vmatprep.subr.mxu0 0.0
        %566 = vmatpush1.msra.mxu0 0.0
        %567 = vmatprep.subr.mxu0 0.0
        %568 = vmatpush1.msra.mxu0 0.0
        %569 = vmatprep.subr.mxu0 0.0
        %570 = vmatpush1.msra.mxu0 0.0
        %571 = vmatprep.subr.mxu0 0.0
        %572 = vmatpush1.msra.mxu0 0.0
        %573 = vmatprep.subr.mxu0 0.0
        %574 = vmatpush1.msra.mxu0 %v539
        %575 = vmatprep.subr.mxu0 0.0
        %576 = vmatpush2.msra.mxu0 0.0
        %577 = vmatprep.subr.mxu0 0.0
        %578 = vmatpush2.msra.mxu0 0.0
        %579 = vmatprep.subr.mxu0 0.0
        %580 = vmatpush2.msra.mxu0 0.0
        %581 = vmatprep.subr.mxu0 0.0
        %582 = vmatpush2.msra.mxu0 0.0
        %583 = vmatprep.subr.mxu0 0.0
        %584 = vmatpush2.msra.mxu0 0.0
        %585 = vmatprep.subr.mxu0 0.0
        %586 = vmatpush2.msra.mxu0 0.0
        %587 = vmatprep.subr.mxu0 0.0
        %588 = vmatpush2.msra.mxu0 0.0
        %589 = vmatprep.subr.mxu0 0.0
        %590 = vmatpush2.msra.mxu0 0.0
        %591 = vmatprep.subr.mxu0 0.0
        %592 = vmatpush2.msra.mxu0 0.0
        %593 = vmatprep.subr.mxu0 0.0
        %594 = vmatpush2.msra.mxu0 0.0
        %595 = vmatprep.subr.mxu0 0.0
        %596 = vmatpush2.msra.mxu0 0.0
        %597 = vmatprep.subr.mxu0 0.0
        %598 = vmatpush2.msra.mxu0 0.0
        %599 = vmatprep.subr.mxu0 0.0
        %600 = vmatpush2.msra.mxu0 0.0
        %601 = vmatprep.subr.mxu0 0.0
        %602 = vmatpush2.msra.mxu0 0.0
        %603 = vmatprep.subr.mxu0 0.0
        %604 = vmatpush2.msra.mxu0 0.0
        %605 = vmatprep.subr.mxu0 0.0
        %606 = vmatpush2.msra.mxu0 0.0
        %607 = vmatprep.mubr.f32.mxu0 0.0
        %608 = vmatmul.mubr.f32.gmra.mxu0 %v541
        %v609 = vpop.f32.mrf.mxu0
        %v610 = vadd.f32 0.0, %v609
        %v611 = vpop.f32.mrf.mxu0
        %612 = vdwg.mxu0
        %614 = vrot.lane.b32.xlu0 %v610, 16
        %v615 = vpop.permute.xlu0 %614
        %vm617 = vcmask 261248
        %618 = vst.msk [vmem:[%s273] sm:$0xff] %vm617, %v615
        %s619 = sand.u32 %s121, 1
        %s620 = scalar_lea.sflag [#allocation3], %s619
        %s621 = sand.u32 %s121, 1
        %s622 = smul.addr %s621, 16
        %s623 = scalar_lea.vmem [#allocation2], %s622
        %p624 = scmp.lt.s32.totalorder %s24, 1
        %s625 = scalar_select %p624, %s24, 1
        %p626 = scmp.lt.s32.totalorder %s23, 0
        %s627 = scalar_select %p626, %s23, 0
        %s628 = sadd.s32 %s627, %s625
        %s629 = smul.addr %s628, 8
        %s630 = scalar_lea.vmem %s4, %s629
        // Predicated region
        $region33: #{multi_head_attention.8} parent=31 // pred_check
          %p631 = pneg %p131
        $region34: #{multi_head_attention.8} parent=31 // pred_check_branch
          %633 = sbr.rel (%p631) target = $region36
        $region35: #{multi_head_attention.8} parent=31 // pred_region
          %s635 = ssub.s32 256, 256
          %636 = vsyncadd %s620, %s635
          %s637 = smul.addr %s24, 2
          %s638 = sadd.s32 %s23, %s637
          %s639 = smul.addr %s638, 128
          %s640 = scalar_lea.hbm %s3, %s639
          %s641 = sshll.u32 %s623, 4
          %s642 = int_to_ptr.vmem [resolvable:$true] %s641
          %647 = dma.vmem_to_hbm [thread:$0]  %s642, 256, %s640, %s620, 128, 128, 8
        $region36: #{multi_head_attention.8} parent=31 // pred_fallthru
          _
        // Predicated region
        $region37: #{multi_head_attention.8} parent=31 // pred_check
          %p648 = pneg %p159
        $region38: #{multi_head_attention.8} parent=31 // pred_check_branch
          %650 = sbr.rel (%p648) target = $region40
        $region39: #{multi_head_attention.8} parent=31 // pred_region
          _
        $region40: #{multi_head_attention.8} parent=31 // pred_fallthru
          _
      $region32: #{multi_head_attention.8} parent=5 // pred_fallthru
        _
      %p651 = scmp.le.s32.totalorder 2, %s14
      // Predicated region
      $region41: #{multi_head_attention.8} parent=5 // pred_check
        %p652 = pneg %p651
      $region42: #{multi_head_attention.8} parent=5 // pred_check_branch
        %654 = sbr.rel (%p652) target = $region44
      $region43: #{multi_head_attention.8} parent=5 // pred_region
        %s655 = ssub.s32 %s14, 2
        // Predicated region
        $region45: #{multi_head_attention.8} parent=43 // pred_check
          %p656 = pneg %p137
        $region46: #{multi_head_attention.8} parent=43 // pred_check_branch
          %658 = sbr.rel (%p656) target = $region48
        $region47: #{multi_head_attention.8} parent=43 // pred_region
          %s659 = sand.u32 %s122, 1
          %s660 = scalar_lea.sflag [#allocation3], %s659
          %s661 = sand.u32 %s122, 1
          %s662 = smul.addr %s661, 16
          %s663 = scalar_lea.vmem [#allocation2], %s662
          %664 = dma.done %s660, 256
        $region48: #{multi_head_attention.8} parent=43 // pred_fallthru
          _
        // Predicated region
        $region49: #{multi_head_attention.8} parent=43 // pred_check
          %p665 = pneg %p165
        $region50: #{multi_head_attention.8} parent=43 // pred_check_branch
          %667 = sbr.rel (%p665) target = $region52
        $region51: #{multi_head_attention.8} parent=43 // pred_region
          %p668 = scmp.lt.s32.totalorder %s26, 1
          %s669 = scalar_select %p668, %s26, 1
          %p670 = scmp.lt.s32.totalorder %s25, 0
          %s671 = scalar_select %p670, %s25, 0
          %s672 = sadd.s32 %s671, %s669
          %s673 = smul.addr %s672, 8
          %s674 = scalar_lea.vmem %s4, %s673
        $region52: #{multi_head_attention.8} parent=43 // pred_fallthru
          _
      $region44: #{multi_head_attention.8} parent=5 // pred_fallthru
        _
    $region6: #{multi_head_attention.8} parent=1 // loop_footer
      %s18 = sadd.s32 1, %s14
    $region7: #{multi_head_attention.8} parent=1 // loop_footer_branch
      %13 = sbr.rel target = $region3
    $region8: #{multi_head_attention.8} parent=1 // loop_exit
      _
    %675 = vsyncpa [#allocation3], 1
    %s676 = scalar_lea.sflag [#allocation3], 1
    %677 = vsyncpa %s676, 1

</llo_original>
